<compile_context>
chip_gen: v5e
topology: v5e:2x2
jax: 0.10.0
libtpu: 0.0.40
codegen_flags: <defaults>
</compile_context>

<pallas_src>
import jax
import jax.numpy as jnp
from jax.experimental import pallas as pl
from jax.experimental.pallas import tpu as pltpu

MATMUL_DTYPE = jnp.bfloat16   # MXU operand dtype (f32 accumulation everywhere)
BN_EPS = 1e-5
_LANES = 128
_VMEM = pl.BlockSpec(memory_space=pltpu.MemorySpace.VMEM)


# ---------------------------------------------------------------------------
# Fused kernel
# ---------------------------------------------------------------------------
def make_fused_kernel(num_gcn, bn_rows, a_pad):
    """Fully fused GCNZinc forward for a fixed layer count / batch geometry."""

    def kernel(adj_ref, xid_ref, snorm_ref, pool_ref, embed_ref,
               w0_ref, wr_ref, bgb_ref, w1_ref, b1_ref, w2_ref, b2_ref,
               out_ref):
        # --- Embedding lookup: exact in-kernel one-hot @ f32 table ---------
        ids = xid_ref[...]                                     # (B*N, 1) int32
        lane = jax.lax.broadcasted_iota(jnp.int32, (bn_rows, a_pad), 1)
        onehot = (lane == ids).astype(jnp.float32)             # (B*N, A')
        h = jnp.dot(onehot, embed_ref[...],
                    preferred_element_type=jnp.float32)        # (B*N, F) f32

        adj = adj_ref[...]                                     # (B*N, B*N) bf16
        snorm = snorm_ref[...]                                 # (B*N, 1)  f32
        hdim = w0_ref.shape[1]

        for l in range(num_gcn):
            w = w0_ref[...] if l == 0 else wr_ref[(l - 1) * hdim:l * hdim, :]
            row = 3 * l
            b = bgb_ref[row:row + 1, :]                        # (1, H) f32
            g = bgb_ref[row + 1:row + 2, :]
            be = bgb_ref[row + 2:row + 3, :]

            # GraphConv (DGL norm='both'): (D^-1/2 A D^-1/2) H W + b, done as
            # one block-diagonal 256-wide aggregation matmul on the flat slab.
            ah = jnp.dot(adj, h.astype(MATMUL_DTYPE),
                         preferred_element_type=jnp.float32)   # (B*N, F)
            z = jnp.dot(ah.astype(MATMUL_DTYPE), w,
                        preferred_element_type=jnp.float32)    # (B*N, H)
            z = (z + b) * snorm                                # h = h * snorm_n

            # BatchNorm1d (training-mode batch stats), folded scale/shift.
            mean = jnp.mean(z, axis=0, keepdims=True)
            var = jnp.maximum(
                jnp.mean(z * z, axis=0, keepdims=True) - mean * mean, 0.0)
            scale = g * jax.lax.rsqrt(var + BN_EPS)
            shift = be - mean * scale
            h = jnp.tanh(z * scale + shift)                    # f32

        # dgl.mean_nodes as a (B, B*N) pooling matmul, then the MLP readout.
        hm = jnp.dot(pool_ref[...], h.astype(MATMUL_DTYPE),
                     preferred_element_type=jnp.float32)       # (B, H)
        hm = jnp.maximum(hm, 0.0)
        h1 = jnp.dot(hm.astype(MATMUL_DTYPE), w1_ref[...],
                     preferred_element_type=jnp.float32) + b1_ref[...]
        h1 = jnp.maximum(h1, 0.0)
        # regressor2 lane-padded to 128 -> (B, 128) unmasked lane-dense store.
        out_ref[...] = (jnp.dot(h1.astype(MATMUL_DTYPE), w2_ref[...],
                                preferred_element_type=jnp.float32)
                        + b2_ref[...])

    return kernel


# ---------------------------------------------------------------------------
# One-time parameter preparation (hoisted out of the per-call hot path)
# ---------------------------------------------------------------------------
def prepare_model(params, batch, nodes):
    # TODO(synk): real ZINC batches have variable node counts; padded rows
    # would need masking in mean_nodes and the BatchNorm statistics (here all
    # graphs are assumed to have exactly `nodes` real nodes).
    embed = params["embed"]
    num_atom, feats = embed.shape
    a_pad = ((num_atom + 7) // 8) * 8
    embed_p = jnp.zeros((a_pad, feats), jnp.float32).at[:num_atom].set(embed)

    layers = params["layers"]
    num_gcn = len(layers)
    hdim = layers[0][0].shape[1]
    w0 = layers[0][0].astype(MATMUL_DTYPE)                        # (F, H)
    if num_gcn > 1:
        wr = jnp.concatenate([w.astype(MATMUL_DTYPE)
                              for (w, _, _, _) in layers[1:]], axis=0)
    else:
        wr = jnp.zeros((hdim, hdim), MATMUL_DTYPE)                # unused stub
    # Stacked (bias, gamma, beta) per layer -> (3*num_gcn, H) f32.
    bgb = jnp.concatenate([jnp.stack([b, g, be])
                           for (_, b, g, be) in layers], axis=0)

    # mean_nodes pooling matrix: row b averages graph b's `nodes` node rows.
    pool = (jnp.repeat(jnp.eye(batch, dtype=jnp.float32), nodes, axis=1)
            / float(nodes)).astype(MATMUL_DTYPE)                  # (B, B*N)

    w1 = params["w1"].astype(MATMUL_DTYPE)
    b1 = params["b1"].reshape(1, -1).astype(jnp.float32)
    h_half = params["w2"].shape[0]
    w2p = (jnp.zeros((h_half, _LANES), jnp.float32)
           .at[:, :1].set(params["w2"]).astype(MATMUL_DTYPE))
    b2p = jnp.zeros((1, _LANES), jnp.float32).at[0, 0].set(params["b2"][0])

    arrays = dict(embed_p=embed_p, w0=w0, wr=wr, bgb=bgb, pool=pool,
                  w1=w1, b1=b1, w2p=w2p, b2p=b2p)
    static = dict(num_gcn=num_gcn, a_pad=a_pad, batch=batch, nodes=nodes)
    return arrays, static


# ---------------------------------------------------------------------------
# Forward wrapper: one pallas_call for the whole network
# ---------------------------------------------------------------------------
def make_forward(static):
    num_gcn = static["num_gcn"]
    a_pad = static["a_pad"]
    batch = static["batch"]
    nodes = static["nodes"]
    bn_rows = batch * nodes
    kernel = make_fused_kernel(num_gcn, bn_rows, a_pad)

    def forward(arrays, adj_bd, x, e, snorm_n, snorm_e):
        """adj_bd: (B*N, B*N) bf16 block-diagonal normalized adjacency;
        x: (B, N) int atom types; snorm_n: (B, N, 1).
        e / snorm_e kept for signature parity with the PyTorch forward (unused)."""
        del e, snorm_e
        x_ids = x.reshape(bn_rows, 1).astype(jnp.int32)
        snorm2 = snorm_n.reshape(bn_rows, 1).astype(jnp.float32)
        out = pl.pallas_call(
            kernel,
            out_shape=jax.ShapeDtypeStruct((batch, _LANES), jnp.float32),
            in_specs=[_VMEM] * 12,
            out_specs=_VMEM,
        )(adj_bd, x_ids, snorm2, arrays["pool"], arrays["embed_p"],
          arrays["w0"], arrays["wr"], arrays["bgb"],
          arrays["w1"], arrays["b1"], arrays["w2p"], arrays["b2p"])
        return out[:, :1]                                    # (B, 1) logits

    return forward


# ---------------------------------------------------------------------------
# Parameter init & graph normalization (glue)
# ---------------------------------------------------------------------------
def init_params(key, num_feats, num_layers, num_hidden, num_atom_type):
    keys = jax.random.split(key, 8 + 2 * (num_layers + 1))
    params = {}
    params["embed"] = 0.1 * jax.random.normal(
        keys[0], (num_atom_type, num_feats), jnp.float32)
    layers = []
    in_dim = num_feats
    for i in range(num_layers + 1):
        w = 0.1 * jax.random.normal(keys[1 + 2 * i], (in_dim, num_hidden),
                                    jnp.float32)
        b = 0.01 * jax.random.normal(keys[2 + 2 * i], (num_hidden,),
                                     jnp.float32)
        gamma = jnp.ones((num_hidden,), jnp.float32)   # BatchNorm1d defaults
        beta = jnp.zeros((num_hidden,), jnp.float32)
        layers.append((w, b, gamma, beta))
        in_dim = num_hidden
    params["layers"] = layers
    k = 3 + 2 * num_layers
    params["w1"] = 0.1 * jax.random.normal(
        keys[k], (num_hidden, num_hidden // 2), jnp.float32)
    params["b1"] = 0.01 * jax.random.normal(
        keys[k + 1], (num_hidden // 2,), jnp.float32)
    params["w2"] = 0.1 * jax.random.normal(
        keys[k + 2], (num_hidden // 2, 1), jnp.float32)
    params["b2"] = 0.01 * jax.random.normal(keys[k + 3], (1,), jnp.float32)
    return params


def normalized_adjacency(adj):
    """D^{-1/2} A D^{-1/2} (DGL GraphConv norm='both'); works batched."""
    deg = jnp.sum(adj, axis=-1)
    inv_sqrt = jnp.where(deg > 0, 1.0 / jnp.sqrt(jnp.maximum(deg, 1e-12)), 0.0)
    return adj * inv_sqrt[..., :, None] * inv_sqrt[..., None, :]


def block_diag_normalized_adjacency(adj):
    """(B, N, N) raw adjacency -> (B*N, B*N) block-diag D^-1/2 A D^-1/2, bf16."""
    adj_hat = normalized_adjacency(adj)
    b, n, _ = adj_hat.shape
    eye = jnp.eye(b, dtype=adj_hat.dtype)
    bd = jnp.einsum('bc,bij->bicj', eye, adj_hat).reshape(b * n, b * n)
    return bd.astype(MATMUL_DTYPE)


# ---------------------------------------------------------------------------
if __name__ == "__main__":
    B = 8             # graphs in the batch
    N = 32            # nodes per graph  (B*N = 256 -> one full MXU tile)
    NUM_FEATS = 32
    NUM_HIDDEN = 32
    NUM_LAYERS = 2    # + the input layer => 3 GraphConv layers total
    NUM_ATOM_TYPE = 28
    NUM_BOND_TYPE = 4

    key = jax.random.PRNGKey(0)
    k_param, k_x, k_e, k_adj = jax.random.split(key, 4)

    params = init_params(k_param, NUM_FEATS, NUM_LAYERS, NUM_HIDDEN,
                         NUM_ATOM_TYPE)
    arrays, static = prepare_model(params, B, N)
    fwd = jax.jit(make_forward(static))

    # Deterministic batch of small graphs: ring + a few random undirected chords.
    idx = jnp.arange(N)
    ring = jnp.zeros((N, N), jnp.float32)
    ring = ring.at[idx, (idx + 1) % N].set(1.0)
    ring = ring.at[(idx + 1) % N, idx].set(1.0)
    adj = jnp.tile(ring[None], (B, 1, 1))
    src = jax.random.randint(k_adj, (B, 16), 0, N)
    dst = (src + 3) % N
    bidx = jnp.broadcast_to(jnp.arange(B)[:, None], (B, 16))
    adj = adj.at[bidx, src, dst].set(1.0)
    adj = adj.at[bidx, dst, src].set(1.0)
    adj = adj * (1.0 - jnp.eye(N, dtype=jnp.float32))[None]   # no self loops
    adj_bd = block_diag_normalized_adjacency(adj)             # (B*N, B*N) bf16

    x = jax.random.randint(k_x, (B, N), 0, NUM_ATOM_TYPE)     # atom types
    num_edges = 2 * N                                         # placeholder (unused)
    e = jax.random.randint(k_e, (B, num_edges), 0, NUM_BOND_TYPE)       # unused
    snorm_n = jnp.full((B, N, 1), 1.0 / jnp.sqrt(float(N)), jnp.float32)
    snorm_e = jnp.full((B, num_edges, 1), 1.0 / jnp.sqrt(float(num_edges)),
                       jnp.float32)                                      # unused

    logits = fwd(arrays, adj_bd, x, e, snorm_n, snorm_e)
    jax.block_until_ready(logits)
    assert logits.shape == (B, 1) and logits.dtype == jnp.float32
    assert bool(jnp.all(jnp.isfinite(logits)))
    print("KERNEL_OK")
</pallas_src>

<mosaic_0001>
module attributes {stable_mosaic.version = 11 : i64} {
  func.func @kernel(%arg0: memref<256x256xbf16, #tpu.memory_space<vmem>>, %arg1: memref<256x1xi32, #tpu.memory_space<vmem>>, %arg2: memref<256x1xf32, #tpu.memory_space<vmem>>, %arg3: memref<8x256xbf16, #tpu.memory_space<vmem>>, %arg4: memref<32x32xf32, #tpu.memory_space<vmem>>, %arg5: memref<32x32xbf16, #tpu.memory_space<vmem>>, %arg6: memref<64x32xbf16, #tpu.memory_space<vmem>>, %arg7: memref<9x32xf32, #tpu.memory_space<vmem>>, %arg8: memref<32x16xbf16, #tpu.memory_space<vmem>>, %arg9: memref<1x16xf32, #tpu.memory_space<vmem>>, %arg10: memref<16x128xbf16, #tpu.memory_space<vmem>>, %arg11: memref<1x128xf32, #tpu.memory_space<vmem>>, %arg12: memref<8x128xf32, #tpu.memory_space<vmem>>) attributes {dimension_semantics = [], scalar_prefetch = 0 : i64, scratch_operands = 0 : i64, tpu.core_type = #tpu.core_type<tc>} {
    %c0 = arith.constant 0 : index
    %c0_0 = arith.constant 0 : index
    %0 = vector.load %arg1[%c0, %c0_0] : memref<256x1xi32, #tpu.memory_space<vmem>>, vector<256x1xi32>
    %1 = tpu.iota {dimensions = array<i32: 1>} : vector<256x32xi32>
    %2 = vector.broadcast %0 : vector<256x1xi32> to vector<256x32xi32>
    %3 = arith.cmpi eq, %1, %2 : vector<256x32xi32>
    %4 = arith.extui %3 : vector<256x32xi1> to vector<256x32xi32>
    %5 = arith.sitofp %4 : vector<256x32xi32> to vector<256x32xf32>
    %c0_1 = arith.constant 0 : index
    %c0_2 = arith.constant 0 : index
    %6 = vector.load %arg4[%c0_1, %c0_2] : memref<32x32xf32, #tpu.memory_space<vmem>>, vector<32x32xf32>
    %cst = arith.constant dense<0.000000e+00> : vector<256x32xf32>
    %7 = tpu.matmul %5, %6, %cst {dimension_numbers = #tpu.dot_dimension_numbers<[1], [0], [0], [1], [0, 0, 1, 1], [], []>} : vector<256x32xf32>, vector<32x32xf32>, vector<256x32xf32> -> vector<256x32xf32>
    %c0_3 = arith.constant 0 : index
    %c0_4 = arith.constant 0 : index
    %8 = vector.load %arg0[%c0_3, %c0_4] : memref<256x256xbf16, #tpu.memory_space<vmem>>, vector<256x256xbf16>
    %c0_5 = arith.constant 0 : index
    %c0_6 = arith.constant 0 : index
    %9 = vector.load %arg2[%c0_5, %c0_6] : memref<256x1xf32, #tpu.memory_space<vmem>>, vector<256x1xf32>
    %c0_7 = arith.constant 0 : index
    %c0_8 = arith.constant 0 : index
    %10 = vector.load %arg5[%c0_7, %c0_8] : memref<32x32xbf16, #tpu.memory_space<vmem>>, vector<32x32xbf16>
    %c0_9 = arith.constant 0 : index
    %c0_10 = arith.constant 0 : index
    %11 = vector.load %arg7[%c0_9, %c0_10] : memref<9x32xf32, #tpu.memory_space<vmem>>, vector<1x32xf32>
    %c1 = arith.constant 1 : index
    %c0_11 = arith.constant 0 : index
    %12 = vector.load %arg7[%c1, %c0_11] : memref<9x32xf32, #tpu.memory_space<vmem>>, vector<1x32xf32>
    %c2 = arith.constant 2 : index
    %c0_12 = arith.constant 0 : index
    %13 = vector.load %arg7[%c2, %c0_12] : memref<9x32xf32, #tpu.memory_space<vmem>>, vector<1x32xf32>
    %14 = arith.truncf %7 : vector<256x32xf32> to vector<256x32xbf16>
    %cst_13 = arith.constant dense<0.000000e+00> : vector<256x32xf32>
    %15 = tpu.matmul %8, %14, %cst_13 {dimension_numbers = #tpu.dot_dimension_numbers<[1], [0], [0], [1], [0, 0, 1, 1], [], []>} : vector<256x256xbf16>, vector<256x32xbf16>, vector<256x32xf32> -> vector<256x32xf32>
    %16 = arith.truncf %15 : vector<256x32xf32> to vector<256x32xbf16>
    %cst_14 = arith.constant dense<0.000000e+00> : vector<256x32xf32>
    %17 = tpu.matmul %16, %10, %cst_14 {dimension_numbers = #tpu.dot_dimension_numbers<[1], [0], [0], [1], [0, 0, 1, 1], [], []>} : vector<256x32xbf16>, vector<32x32xbf16>, vector<256x32xf32> -> vector<256x32xf32>
    %18 = vector.broadcast %11 : vector<1x32xf32> to vector<256x32xf32>
    %19 = arith.addf %17, %18 : vector<256x32xf32>
    %20 = vector.broadcast %9 : vector<256x1xf32> to vector<256x32xf32>
    %21 = arith.mulf %19, %20 : vector<256x32xf32>
    %cst_15 = arith.constant dense<0.000000e+00> : vector<32xf32>
    %22 = vector.multi_reduction <add>, %21, %cst_15 [0] : vector<256x32xf32> to vector<32xf32>
    %23 = vector.shape_cast %22 : vector<32xf32> to vector<1x32xf32>
    %cst_16 = arith.constant 2.560000e+02 : f32
    %24 = vector.broadcast %cst_16 : f32 to vector<1x32xf32>
    %25 = arith.divf %23, %24 : vector<1x32xf32>
    %26 = arith.mulf %21, %21 : vector<256x32xf32>
    %cst_17 = arith.constant dense<0.000000e+00> : vector<32xf32>
    %27 = vector.multi_reduction <add>, %26, %cst_17 [0] : vector<256x32xf32> to vector<32xf32>
    %28 = vector.shape_cast %27 : vector<32xf32> to vector<1x32xf32>
    %cst_18 = arith.constant 2.560000e+02 : f32
    %29 = vector.broadcast %cst_18 : f32 to vector<1x32xf32>
    %30 = arith.divf %28, %29 : vector<1x32xf32>
    %31 = arith.mulf %25, %25 : vector<1x32xf32>
    %32 = arith.subf %30, %31 : vector<1x32xf32>
    %cst_19 = arith.constant 0.000000e+00 : f32
    %33 = vector.broadcast %cst_19 : f32 to vector<1x32xf32>
    %34 = arith.maximumf %32, %33 : vector<1x32xf32>
    %cst_20 = arith.constant 9.99999974E-6 : f32
    %35 = vector.broadcast %cst_20 : f32 to vector<1x32xf32>
    %36 = arith.addf %34, %35 : vector<1x32xf32>
    %37 = math.rsqrt %36 : vector<1x32xf32>
    %38 = arith.mulf %12, %37 : vector<1x32xf32>
    %39 = arith.mulf %25, %38 : vector<1x32xf32>
    %40 = arith.subf %13, %39 : vector<1x32xf32>
    %41 = vector.broadcast %38 : vector<1x32xf32> to vector<256x32xf32>
    %42 = arith.mulf %21, %41 : vector<256x32xf32>
    %43 = vector.broadcast %40 : vector<1x32xf32> to vector<256x32xf32>
    %44 = arith.addf %42, %43 : vector<256x32xf32>
    %45 = math.tanh %44 : vector<256x32xf32>
    %c0_21 = arith.constant 0 : index
    %c0_22 = arith.constant 0 : index
    %46 = vector.load %arg6[%c0_21, %c0_22] : memref<64x32xbf16, #tpu.memory_space<vmem>>, vector<32x32xbf16>
    %c3 = arith.constant 3 : index
    %c0_23 = arith.constant 0 : index
    %47 = vector.load %arg7[%c3, %c0_23] : memref<9x32xf32, #tpu.memory_space<vmem>>, vector<1x32xf32>
    %c4 = arith.constant 4 : index
    %c0_24 = arith.constant 0 : index
    %48 = vector.load %arg7[%c4, %c0_24] : memref<9x32xf32, #tpu.memory_space<vmem>>, vector<1x32xf32>
    %c5 = arith.constant 5 : index
    %c0_25 = arith.constant 0 : index
    %49 = vector.load %arg7[%c5, %c0_25] : memref<9x32xf32, #tpu.memory_space<vmem>>, vector<1x32xf32>
    %50 = arith.truncf %45 : vector<256x32xf32> to vector<256x32xbf16>
    %cst_26 = arith.constant dense<0.000000e+00> : vector<256x32xf32>
    %51 = tpu.matmul %8, %50, %cst_26 {dimension_numbers = #tpu.dot_dimension_numbers<[1], [0], [0], [1], [0, 0, 1, 1], [], []>} : vector<256x256xbf16>, vector<256x32xbf16>, vector<256x32xf32> -> vector<256x32xf32>
    %52 = arith.truncf %51 : vector<256x32xf32> to vector<256x32xbf16>
    %cst_27 = arith.constant dense<0.000000e+00> : vector<256x32xf32>
    %53 = tpu.matmul %52, %46, %cst_27 {dimension_numbers = #tpu.dot_dimension_numbers<[1], [0], [0], [1], [0, 0, 1, 1], [], []>} : vector<256x32xbf16>, vector<32x32xbf16>, vector<256x32xf32> -> vector<256x32xf32>
    %54 = vector.broadcast %47 : vector<1x32xf32> to vector<256x32xf32>
    %55 = arith.addf %53, %54 : vector<256x32xf32>
    %56 = vector.broadcast %9 : vector<256x1xf32> to vector<256x32xf32>
    %57 = arith.mulf %55, %56 : vector<256x32xf32>
    %cst_28 = arith.constant dense<0.000000e+00> : vector<32xf32>
    %58 = vector.multi_reduction <add>, %57, %cst_28 [0] : vector<256x32xf32> to vector<32xf32>
    %59 = vector.shape_cast %58 : vector<32xf32> to vector<1x32xf32>
    %cst_29 = arith.constant 2.560000e+02 : f32
    %60 = vector.broadcast %cst_29 : f32 to vector<1x32xf32>
    %61 = arith.divf %59, %60 : vector<1x32xf32>
    %62 = arith.mulf %57, %57 : vector<256x32xf32>
    %cst_30 = arith.constant dense<0.000000e+00> : vector<32xf32>
    %63 = vector.multi_reduction <add>, %62, %cst_30 [0] : vector<256x32xf32> to vector<32xf32>
    %64 = vector.shape_cast %63 : vector<32xf32> to vector<1x32xf32>
    %cst_31 = arith.constant 2.560000e+02 : f32
    %65 = vector.broadcast %cst_31 : f32 to vector<1x32xf32>
    %66 = arith.divf %64, %65 : vector<1x32xf32>
    %67 = arith.mulf %61, %61 : vector<1x32xf32>
    %68 = arith.subf %66, %67 : vector<1x32xf32>
    %cst_32 = arith.constant 0.000000e+00 : f32
    %69 = vector.broadcast %cst_32 : f32 to vector<1x32xf32>
    %70 = arith.maximumf %68, %69 : vector<1x32xf32>
    %cst_33 = arith.constant 9.99999974E-6 : f32
    %71 = vector.broadcast %cst_33 : f32 to vector<1x32xf32>
    %72 = arith.addf %70, %71 : vector<1x32xf32>
    %73 = math.rsqrt %72 : vector<1x32xf32>
    %74 = arith.mulf %48, %73 : vector<1x32xf32>
    %75 = arith.mulf %61, %74 : vector<1x32xf32>
    %76 = arith.subf %49, %75 : vector<1x32xf32>
    %77 = vector.broadcast %74 : vector<1x32xf32> to vector<256x32xf32>
    %78 = arith.mulf %57, %77 : vector<256x32xf32>
    %79 = vector.broadcast %76 : vector<1x32xf32> to vector<256x32xf32>
    %80 = arith.addf %78, %79 : vector<256x32xf32>
    %81 = math.tanh %80 : vector<256x32xf32>
    %c32 = arith.constant 32 : index
    %c0_34 = arith.constant 0 : index
    %82 = vector.load %arg6[%c32, %c0_34] : memref<64x32xbf16, #tpu.memory_space<vmem>>, vector<32x32xbf16>
    %c6 = arith.constant 6 : index
    %c0_35 = arith.constant 0 : index
    %83 = vector.load %arg7[%c6, %c0_35] : memref<9x32xf32, #tpu.memory_space<vmem>>, vector<1x32xf32>
    %c7 = arith.constant 7 : index
    %c0_36 = arith.constant 0 : index
    %84 = vector.load %arg7[%c7, %c0_36] : memref<9x32xf32, #tpu.memory_space<vmem>>, vector<1x32xf32>
    %c8 = arith.constant 8 : index
    %c0_37 = arith.constant 0 : index
    %85 = vector.load %arg7[%c8, %c0_37] : memref<9x32xf32, #tpu.memory_space<vmem>>, vector<1x32xf32>
    %86 = arith.truncf %81 : vector<256x32xf32> to vector<256x32xbf16>
    %cst_38 = arith.constant dense<0.000000e+00> : vector<256x32xf32>
    %87 = tpu.matmul %8, %86, %cst_38 {dimension_numbers = #tpu.dot_dimension_numbers<[1], [0], [0], [1], [0, 0, 1, 1], [], []>} : vector<256x256xbf16>, vector<256x32xbf16>, vector<256x32xf32> -> vector<256x32xf32>
    %88 = arith.truncf %87 : vector<256x32xf32> to vector<256x32xbf16>
    %cst_39 = arith.constant dense<0.000000e+00> : vector<256x32xf32>
    %89 = tpu.matmul %88, %82, %cst_39 {dimension_numbers = #tpu.dot_dimension_numbers<[1], [0], [0], [1], [0, 0, 1, 1], [], []>} : vector<256x32xbf16>, vector<32x32xbf16>, vector<256x32xf32> -> vector<256x32xf32>
    %90 = vector.broadcast %83 : vector<1x32xf32> to vector<256x32xf32>
    %91 = arith.addf %89, %90 : vector<256x32xf32>
    %92 = vector.broadcast %9 : vector<256x1xf32> to vector<256x32xf32>
    %93 = arith.mulf %91, %92 : vector<256x32xf32>
    %cst_40 = arith.constant dense<0.000000e+00> : vector<32xf32>
    %94 = vector.multi_reduction <add>, %93, %cst_40 [0] : vector<256x32xf32> to vector<32xf32>
    %95 = vector.shape_cast %94 : vector<32xf32> to vector<1x32xf32>
    %cst_41 = arith.constant 2.560000e+02 : f32
    %96 = vector.broadcast %cst_41 : f32 to vector<1x32xf32>
    %97 = arith.divf %95, %96 : vector<1x32xf32>
    %98 = arith.mulf %93, %93 : vector<256x32xf32>
    %cst_42 = arith.constant dense<0.000000e+00> : vector<32xf32>
    %99 = vector.multi_reduction <add>, %98, %cst_42 [0] : vector<256x32xf32> to vector<32xf32>
    %100 = vector.shape_cast %99 : vector<32xf32> to vector<1x32xf32>
    %cst_43 = arith.constant 2.560000e+02 : f32
    %101 = vector.broadcast %cst_43 : f32 to vector<1x32xf32>
    %102 = arith.divf %100, %101 : vector<1x32xf32>
    %103 = arith.mulf %97, %97 : vector<1x32xf32>
    %104 = arith.subf %102, %103 : vector<1x32xf32>
    %cst_44 = arith.constant 0.000000e+00 : f32
    %105 = vector.broadcast %cst_44 : f32 to vector<1x32xf32>
    %106 = arith.maximumf %104, %105 : vector<1x32xf32>
    %cst_45 = arith.constant 9.99999974E-6 : f32
    %107 = vector.broadcast %cst_45 : f32 to vector<1x32xf32>
    %108 = arith.addf %106, %107 : vector<1x32xf32>
    %109 = math.rsqrt %108 : vector<1x32xf32>
    %110 = arith.mulf %84, %109 : vector<1x32xf32>
    %111 = arith.mulf %97, %110 : vector<1x32xf32>
    %112 = arith.subf %85, %111 : vector<1x32xf32>
    %113 = vector.broadcast %110 : vector<1x32xf32> to vector<256x32xf32>
    %114 = arith.mulf %93, %113 : vector<256x32xf32>
    %115 = vector.broadcast %112 : vector<1x32xf32> to vector<256x32xf32>
    %116 = arith.addf %114, %115 : vector<256x32xf32>
    %117 = math.tanh %116 : vector<256x32xf32>
    %c0_46 = arith.constant 0 : index
    %c0_47 = arith.constant 0 : index
    %118 = vector.load %arg3[%c0_46, %c0_47] : memref<8x256xbf16, #tpu.memory_space<vmem>>, vector<8x256xbf16>
    %119 = arith.truncf %117 : vector<256x32xf32> to vector<256x32xbf16>
    %cst_48 = arith.constant dense<0.000000e+00> : vector<8x32xf32>
    %120 = tpu.matmul %118, %119, %cst_48 {dimension_numbers = #tpu.dot_dimension_numbers<[1], [0], [0], [1], [0, 0, 1, 1], [], []>} : vector<8x256xbf16>, vector<256x32xbf16>, vector<8x32xf32> -> vector<8x32xf32>
    %cst_49 = arith.constant 0.000000e+00 : f32
    %121 = vector.broadcast %cst_49 : f32 to vector<8x32xf32>
    %122 = arith.maximumf %120, %121 : vector<8x32xf32>
    %123 = arith.truncf %122 : vector<8x32xf32> to vector<8x32xbf16>
    %c0_50 = arith.constant 0 : index
    %c0_51 = arith.constant 0 : index
    %124 = vector.load %arg8[%c0_50, %c0_51] : memref<32x16xbf16, #tpu.memory_space<vmem>>, vector<32x16xbf16>
    %cst_52 = arith.constant dense<0.000000e+00> : vector<8x16xf32>
    %125 = tpu.matmul %123, %124, %cst_52 {dimension_numbers = #tpu.dot_dimension_numbers<[1], [0], [0], [1], [0, 0, 1, 1], [], []>} : vector<8x32xbf16>, vector<32x16xbf16>, vector<8x16xf32> -> vector<8x16xf32>
    %c0_53 = arith.constant 0 : index
    %c0_54 = arith.constant 0 : index
    %126 = vector.load %arg9[%c0_53, %c0_54] : memref<1x16xf32, #tpu.memory_space<vmem>>, vector<1x16xf32>
    %127 = vector.broadcast %126 : vector<1x16xf32> to vector<8x16xf32>
    %128 = arith.addf %125, %127 : vector<8x16xf32>
    %cst_55 = arith.constant 0.000000e+00 : f32
    %129 = vector.broadcast %cst_55 : f32 to vector<8x16xf32>
    %130 = arith.maximumf %128, %129 : vector<8x16xf32>
    %131 = arith.truncf %130 : vector<8x16xf32> to vector<8x16xbf16>
    %c0_56 = arith.constant 0 : index
    %c0_57 = arith.constant 0 : index
    %132 = vector.load %arg10[%c0_56, %c0_57] : memref<16x128xbf16, #tpu.memory_space<vmem>>, vector<16x128xbf16>
    %cst_58 = arith.constant dense<0.000000e+00> : vector<8x128xf32>
    %133 = tpu.matmul %131, %132, %cst_58 {dimension_numbers = #tpu.dot_dimension_numbers<[1], [0], [0], [1], [0, 0, 1, 1], [], []>} : vector<8x16xbf16>, vector<16x128xbf16>, vector<8x128xf32> -> vector<8x128xf32>
    %c0_59 = arith.constant 0 : index
    %c0_60 = arith.constant 0 : index
    %134 = vector.load %arg11[%c0_59, %c0_60] : memref<1x128xf32, #tpu.memory_space<vmem>>, vector<1x128xf32>
    %135 = vector.broadcast %134 : vector<1x128xf32> to vector<8x128xf32>
    %136 = arith.addf %133, %135 : vector<8x128xf32>
    %c0_61 = arith.constant 0 : index
    %c0_62 = arith.constant 0 : index
    %137 = vector.load %arg12[%c0_61, %c0_62] : memref<8x128xf32, #tpu.memory_space<vmem>>, vector<8x128xf32>
    tpu.vector_store %arg12[%c0_61, %c0_62], %136 {strides = array<i32>} : memref<8x128xf32, #tpu.memory_space<vmem>>, vector<8x128xf32>,
    return
  }
}

</mosaic_0001>

<llo_original>
// kernel: forward.1
$region0: #{forward.1}
  #allocation0 [shape = 'u32[]', space=smem, size = 0x4, offset = 0x4, fixed_abs, tag = 'smem constant byte address 0x4 - core index']
  #allocation1 [shape = 'u32[72,128]{1,0:T(1,128)}', space=vmem, size = 0x9000, scoped, tag = 'internal scratch']
  %s0 = inlined_call_operand.vmem [shape: bf16[256,256], index: 0, kind: input, shape index: {}]
  %s1 = inlined_call_operand.vmem [shape: s32[256,1], index: 1, kind: input, shape index: {}]
  %s2 = inlined_call_operand.vmem [shape: f32[256,1], index: 2, kind: input, shape index: {}]
  %s3 = inlined_call_operand.vmem [shape: bf16[8,256], index: 3, kind: input, shape index: {}]
  %s4 = inlined_call_operand.vmem [shape: f32[32,32], index: 4, kind: input, shape index: {}]
  %s5 = inlined_call_operand.vmem [shape: bf16[32,32], index: 5, kind: input, shape index: {}]
  %s6 = inlined_call_operand.vmem [shape: bf16[64,32], index: 6, kind: input, shape index: {}]
  %s7 = inlined_call_operand.vmem [shape: f32[9,32], index: 7, kind: input, shape index: {}]
  %s8 = inlined_call_operand.vmem [shape: bf16[32,16], index: 8, kind: input, shape index: {}]
  %s9 = inlined_call_operand.vmem [shape: f32[1,16], index: 9, kind: input, shape index: {}]
  %s10 = inlined_call_operand.vmem [shape: bf16[16,128], index: 10, kind: input, shape index: {}]
  %s11 = inlined_call_operand.vmem [shape: f32[1,128], index: 11, kind: input, shape index: {}]
  %s12 = inlined_call_operand.vmem [shape: f32[8,128], index: 12, kind: output, shape index: {}]
  %s13 = sld [smem:[#allocation0]]
  $region58: #{forward.1} parent=0
    _
  %s15 = ssub.s32 1, %s13
  %s16 = scalar_select 0, %s15, %s13
  // Predicated region
  $region2: #{forward.1} parent=0 // pred_check
    _
  $region3: #{forward.1} parent=0 // pred_check_branch
    %18 = sbr.rel (0) target = $region5
  $region4: #{forward.1} parent=0 // pred_region
    _
  $region5: #{forward.1} parent=0 // pred_fallthru
    _
  // Predicated region
  $region6: #{forward.1} parent=0 // pred_check
    _
  $region7: #{forward.1} parent=0 // pred_check_branch
    %20 = sbr.rel (0) target = $region9
  $region8: #{forward.1} parent=0 // pred_region
    _
  $region9: #{forward.1} parent=0 // pred_fallthru
    _
  // Predicated region
  $region10: #{forward.1} parent=0 // pred_check
    _
  $region11: #{forward.1} parent=0 // pred_check_branch
    %22 = sbr.rel (0) target = $region13
  $region12: #{forward.1} parent=0 // pred_region
    _
  $region13: #{forward.1} parent=0 // pred_fallthru
    _
  // Predicated region
  $region14: #{forward.1} parent=0 // pred_check
    _
  $region15: #{forward.1} parent=0 // pred_check_branch
    %24 = sbr.rel (0) target = $region17
  $region16: #{forward.1} parent=0 // pred_region
    _
  $region17: #{forward.1} parent=0 // pred_fallthru
    _
  // Predicated region
  $region18: #{forward.1} parent=0 // pred_check
    _
  $region19: #{forward.1} parent=0 // pred_check_branch
    %26 = sbr.rel (0) target = $region21
  $region20: #{forward.1} parent=0 // pred_region
    _
  $region21: #{forward.1} parent=0 // pred_fallthru
    _
  // Predicated region
  $region22: #{forward.1} parent=0 // pred_check
    _
  $region23: #{forward.1} parent=0 // pred_check_branch
    %28 = sbr.rel (0) target = $region25
  $region24: #{forward.1} parent=0 // pred_region
    _
  $region25: #{forward.1} parent=0 // pred_fallthru
    _
  // Predicated region
  $region26: #{forward.1} parent=0 // pred_check
    _
  $region27: #{forward.1} parent=0 // pred_check_branch
    %30 = sbr.rel (0) target = $region29
  $region28: #{forward.1} parent=0 // pred_region
    _
  $region29: #{forward.1} parent=0 // pred_fallthru
    _
  // Predicated region
  $region30: #{forward.1} parent=0 // pred_check
    _
  $region31: #{forward.1} parent=0 // pred_check_branch
    %32 = sbr.rel (0) target = $region33
  $region32: #{forward.1} parent=0 // pred_region
    _
  $region33: #{forward.1} parent=0 // pred_fallthru
    _
  // Predicated region
  $region34: #{forward.1} parent=0 // pred_check
    _
  $region35: #{forward.1} parent=0 // pred_check_branch
    %34 = sbr.rel (0) target = $region37
  $region36: #{forward.1} parent=0 // pred_region
    _
  $region37: #{forward.1} parent=0 // pred_fallthru
    _
  // Predicated region
  $region38: #{forward.1} parent=0 // pred_check
    _
  $region39: #{forward.1} parent=0 // pred_check_branch
    %36 = sbr.rel (0) target = $region41
  $region40: #{forward.1} parent=0 // pred_region
    _
  $region41: #{forward.1} parent=0 // pred_fallthru
    _
  // Predicated region
  $region42: #{forward.1} parent=0 // pred_check
    _
  $region43: #{forward.1} parent=0 // pred_check_branch
    %38 = sbr.rel (0) target = $region45
  $region44: #{forward.1} parent=0 // pred_region
    _
  $region45: #{forward.1} parent=0 // pred_fallthru
    _
  // Predicated region
  $region46: #{forward.1} parent=0 // pred_check
    _
  $region47: #{forward.1} parent=0 // pred_check_branch
    %40 = sbr.rel (0) target = $region49
  $region48: #{forward.1} parent=0 // pred_region
    _
  $region49: #{forward.1} parent=0 // pred_fallthru
    _
  %v42 = vld [vmem:[%s1] sm:$0xff]
  %v43 = vld [vmem:[%s1 + $0x8] sm:$0xff]
  %v44 = vld [vmem:[%s1 + $0x10] sm:$0xff]
  %v45 = vld [vmem:[%s1 + $0x18] sm:$0xff]
  %v46 = vld [vmem:[%s1 + $0x20] sm:$0xff]
  %v47 = vld [vmem:[%s1 + $0x28] sm:$0xff]
  %v48 = vld [vmem:[%s1 + $0x30] sm:$0xff]
  %v49 = vld [vmem:[%s1 + $0x38] sm:$0xff]
  %v50 = vld [vmem:[%s1 + $0x40] sm:$0xff]
  %v51 = vld [vmem:[%s1 + $0x48] sm:$0xff]
  %v52 = vld [vmem:[%s1 + $0x50] sm:$0xff]
  %v53 = vld [vmem:[%s1 + $0x58] sm:$0xff]
  %v54 = vld [vmem:[%s1 + $0x60] sm:$0xff]
  %v55 = vld [vmem:[%s1 + $0x68] sm:$0xff]
  %v56 = vld [vmem:[%s1 + $0x70] sm:$0xff]
  %v57 = vld [vmem:[%s1 + $0x78] sm:$0xff]
  %v58 = vld [vmem:[%s1 + $0x80] sm:$0xff]
  %v59 = vld [vmem:[%s1 + $0x88] sm:$0xff]
  %v60 = vld [vmem:[%s1 + $0x90] sm:$0xff]
  %v61 = vld [vmem:[%s1 + $0x98] sm:$0xff]
  %v62 = vld [vmem:[%s1 + $0xa0] sm:$0xff]
  %v63 = vld [vmem:[%s1 + $0xa8] sm:$0xff]
  %v64 = vld [vmem:[%s1 + $0xb0] sm:$0xff]
  %v65 = vld [vmem:[%s1 + $0xb8] sm:$0xff]
  %v66 = vld [vmem:[%s1 + $0xc0] sm:$0xff]
  %v67 = vld [vmem:[%s1 + $0xc8] sm:$0xff]
  %v68 = vld [vmem:[%s1 + $0xd0] sm:$0xff]
  %v69 = vld [vmem:[%s1 + $0xd8] sm:$0xff]
  %v70 = vld [vmem:[%s1 + $0xe0] sm:$0xff]
  %v71 = vld [vmem:[%s1 + $0xe8] sm:$0xff]
  %v72 = vld [vmem:[%s1 + $0xf0] sm:$0xff]
  %v73 = vld [vmem:[%s1 + $0xf8] sm:$0xff]
  %v74 = vlaneseq
  %v75 = vand.u32 %v74, 127
  %76 = vset.pattern.permute.xlu0 0
  %77 = vperm.xlu0 %76, %v42
  %v78 = vpop.permute.xlu0 %77
  %79 = vset.pattern.permute.xlu0 0
  %80 = vperm.xlu0 %79, %v43
  %v81 = vpop.permute.xlu0 %80
  %82 = vset.pattern.permute.xlu0 0
  %83 = vperm.xlu0 %82, %v44
  %v84 = vpop.permute.xlu0 %83
  %85 = vset.pattern.permute.xlu0 0
  %86 = vperm.xlu0 %85, %v45
  %v87 = vpop.permute.xlu0 %86
  %88 = vset.pattern.permute.xlu0 0
  %89 = vperm.xlu0 %88, %v46
  %v90 = vpop.permute.xlu0 %89
  %91 = vset.pattern.permute.xlu0 0
  %92 = vperm.xlu0 %91, %v47
  %v93 = vpop.permute.xlu0 %92
  %94 = vset.pattern.permute.xlu0 0
  %95 = vperm.xlu0 %94, %v48
  %v96 = vpop.permute.xlu0 %95
  %97 = vset.pattern.permute.xlu0 0
  %98 = vperm.xlu0 %97, %v49
  %v99 = vpop.permute.xlu0 %98
  %100 = vset.pattern.permute.xlu0 0
  %101 = vperm.xlu0 %100, %v50
  %v102 = vpop.permute.xlu0 %101
  %103 = vset.pattern.permute.xlu0 0
  %104 = vperm.xlu0 %103, %v51
  %v105 = vpop.permute.xlu0 %104
  %106 = vset.pattern.permute.xlu0 0
  %107 = vperm.xlu0 %106, %v52
  %v108 = vpop.permute.xlu0 %107
  %109 = vset.pattern.permute.xlu0 0
  %110 = vperm.xlu0 %109, %v53
  %v111 = vpop.permute.xlu0 %110
  %112 = vset.pattern.permute.xlu0 0
  %113 = vperm.xlu0 %112, %v54
  %v114 = vpop.permute.xlu0 %113
  %115 = vset.pattern.permute.xlu0 0
  %116 = vperm.xlu0 %115, %v55
  %v117 = vpop.permute.xlu0 %116
  %118 = vset.pattern.permute.xlu0 0
  %119 = vperm.xlu0 %118, %v56
  %v120 = vpop.permute.xlu0 %119
  %121 = vset.pattern.permute.xlu0 0
  %122 = vperm.xlu0 %121, %v57
  %v123 = vpop.permute.xlu0 %122
  %124 = vset.pattern.permute.xlu0 0
  %125 = vperm.xlu0 %124, %v58
  %v126 = vpop.permute.xlu0 %125
  %127 = vset.pattern.permute.xlu0 0
  %128 = vperm.xlu0 %127, %v59
  %v129 = vpop.permute.xlu0 %128
  %130 = vset.pattern.permute.xlu0 0
  %131 = vperm.xlu0 %130, %v60
  %v132 = vpop.permute.xlu0 %131
  %133 = vset.pattern.permute.xlu0 0
  %134 = vperm.xlu0 %133, %v61
  %v135 = vpop.permute.xlu0 %134
  %136 = vset.pattern.permute.xlu0 0
  %137 = vperm.xlu0 %136, %v62
  %v138 = vpop.permute.xlu0 %137
  %139 = vset.pattern.permute.xlu0 0
  %140 = vperm.xlu0 %139, %v63
  %v141 = vpop.permute.xlu0 %140
  %142 = vset.pattern.permute.xlu0 0
  %143 = vperm.xlu0 %142, %v64
  %v144 = vpop.permute.xlu0 %143
  %145 = vset.pattern.permute.xlu0 0
  %146 = vperm.xlu0 %145, %v65
  %v147 = vpop.permute.xlu0 %146
  %148 = vset.pattern.permute.xlu0 0
  %149 = vperm.xlu0 %148, %v66
  %v150 = vpop.permute.xlu0 %149
  %151 = vset.pattern.permute.xlu0 0
  %152 = vperm.xlu0 %151, %v67
  %v153 = vpop.permute.xlu0 %152
  %154 = vset.pattern.permute.xlu0 0
  %155 = vperm.xlu0 %154, %v68
  %v156 = vpop.permute.xlu0 %155
  %157 = vset.pattern.permute.xlu0 0
  %158 = vperm.xlu0 %157, %v69
  %v159 = vpop.permute.xlu0 %158
  %160 = vset.pattern.permute.xlu0 0
  %161 = vperm.xlu0 %160, %v70
  %v162 = vpop.permute.xlu0 %161
  %163 = vset.pattern.permute.xlu0 0
  %164 = vperm.xlu0 %163, %v71
  %v165 = vpop.permute.xlu0 %164
  %166 = vset.pattern.permute.xlu0 0
  %167 = vperm.xlu0 %166, %v72
  %v168 = vpop.permute.xlu0 %167
  %169 = vset.pattern.permute.xlu0 0
  %170 = vperm.xlu0 %169, %v73
  %v171 = vpop.permute.xlu0 %170
  %vm172 = vcmp.eq.s32.totalorder %v75, %v78
  %vm173 = vcmp.eq.s32.totalorder %v75, %v81
  %vm174 = vcmp.eq.s32.totalorder %v75, %v84
  %vm175 = vcmp.eq.s32.totalorder %v75, %v87
  %vm176 = vcmp.eq.s32.totalorder %v75, %v90
  %vm177 = vcmp.eq.s32.totalorder %v75, %v93
  %vm178 = vcmp.eq.s32.totalorder %v75, %v96
  %vm179 = vcmp.eq.s32.totalorder %v75, %v99
  %vm180 = vcmp.eq.s32.totalorder %v75, %v102
  %vm181 = vcmp.eq.s32.totalorder %v75, %v105
  %vm182 = vcmp.eq.s32.totalorder %v75, %v108
  %vm183 = vcmp.eq.s32.totalorder %v75, %v111
  %vm184 = vcmp.eq.s32.totalorder %v75, %v114
  %vm185 = vcmp.eq.s32.totalorder %v75, %v117
  %vm186 = vcmp.eq.s32.totalorder %v75, %v120
  %vm187 = vcmp.eq.s32.totalorder %v75, %v123
  %vm188 = vcmp.eq.s32.totalorder %v75, %v126
  %vm189 = vcmp.eq.s32.totalorder %v75, %v129
  %vm190 = vcmp.eq.s32.totalorder %v75, %v132
  %vm191 = vcmp.eq.s32.totalorder %v75, %v135
  %vm192 = vcmp.eq.s32.totalorder %v75, %v138
  %vm193 = vcmp.eq.s32.totalorder %v75, %v141
  %vm194 = vcmp.eq.s32.totalorder %v75, %v144
  %vm195 = vcmp.eq.s32.totalorder %v75, %v147
  %vm196 = vcmp.eq.s32.totalorder %v75, %v150
  %vm197 = vcmp.eq.s32.totalorder %v75, %v153
  %vm198 = vcmp.eq.s32.totalorder %v75, %v156
  %vm199 = vcmp.eq.s32.totalorder %v75, %v159
  %vm200 = vcmp.eq.s32.totalorder %v75, %v162
  %vm201 = vcmp.eq.s32.totalorder %v75, %v165
  %vm202 = vcmp.eq.s32.totalorder %v75, %v168
  %vm203 = vcmp.eq.s32.totalorder %v75, %v171
  %v204 = vsel %vm172, 1, 0
  %v205 = vsel %vm173, 1, 0
  %v206 = vsel %vm174, 1, 0
  %v207 = vsel %vm175, 1, 0
  %v208 = vsel %vm176, 1, 0
  %v209 = vsel %vm177, 1, 0
  %v210 = vsel %vm178, 1, 0
  %v211 = vsel %vm179, 1, 0
  %v212 = vsel %vm180, 1, 0
  %v213 = vsel %vm181, 1, 0
  %v214 = vsel %vm182, 1, 0
  %v215 = vsel %vm183, 1, 0
  %v216 = vsel %vm184, 1, 0
  %v217 = vsel %vm185, 1, 0
  %v218 = vsel %vm186, 1, 0
  %v219 = vsel %vm187, 1, 0
  %v220 = vsel %vm188, 1, 0
  %v221 = vsel %vm189, 1, 0
  %v222 = vsel %vm190, 1, 0
  %v223 = vsel %vm191, 1, 0
  %v224 = vsel %vm192, 1, 0
  %v225 = vsel %vm193, 1, 0
  %v226 = vsel %vm194, 1, 0
  %v227 = vsel %vm195, 1, 0
  %v228 = vsel %vm196, 1, 0
  %v229 = vsel %vm197, 1, 0
  %v230 = vsel %vm198, 1, 0
  %v231 = vsel %vm199, 1, 0
  %v232 = vsel %vm200, 1, 0
  %v233 = vsel %vm201, 1, 0
  %v234 = vsel %vm202, 1, 0
  %v235 = vsel %vm203, 1, 0
  %v236 = vcvt.s32.f32 %v204
  %v237 = vcvt.s32.f32 %v205
  %v238 = vcvt.s32.f32 %v206
  %v239 = vcvt.s32.f32 %v207
  %v240 = vcvt.s32.f32 %v208
  %v241 = vcvt.s32.f32 %v209
  %v242 = vcvt.s32.f32 %v210
  %v243 = vcvt.s32.f32 %v211
  %v244 = vcvt.s32.f32 %v212
  %v245 = vcvt.s32.f32 %v213
  %v246 = vcvt.s32.f32 %v214
  %v247 = vcvt.s32.f32 %v215
  %v248 = vcvt.s32.f32 %v216
  %v249 = vcvt.s32.f32 %v217
  %v250 = vcvt.s32.f32 %v218
  %v251 = vcvt.s32.f32 %v219
  %v252 = vcvt.s32.f32 %v220
  %v253 = vcvt.s32.f32 %v221
  %v254 = vcvt.s32.f32 %v222
  %v255 = vcvt.s32.f32 %v223
  %v256 = vcvt.s32.f32 %v224
  %v257 = vcvt.s32.f32 %v225
  %v258 = vcvt.s32.f32 %v226
  %v259 = vcvt.s32.f32 %v227
  %v260 = vcvt.s32.f32 %v228
  %v261 = vcvt.s32.f32 %v229
  %v262 = vcvt.s32.f32 %v230
  %v263 = vcvt.s32.f32 %v231
  %v264 = vcvt.s32.f32 %v232
  %v265 = vcvt.s32.f32 %v233
  %v266 = vcvt.s32.f32 %v234
  %v267 = vcvt.s32.f32 %v235
  %v268 = vld [vmem:[%s4] sm:$0xff]
  %v269 = vld [vmem:[%s4 + $0x8] sm:$0xff]
  %v270 = vld [vmem:[%s4 + $0x10] sm:$0xff]
  %v271 = vld [vmem:[%s4 + $0x18] sm:$0xff]
  %vm272 = vcmask 261120
  %v274 = vsel %vm272, %v236, 0
  %v277 = vsel %vm272, %v237, 0
  %v280 = vsel %vm272, %v238, 0
  %v283 = vsel %vm272, %v239, 0
  %v286 = vsel %vm272, %v240, 0
  %v289 = vsel %vm272, %v241, 0
  %v292 = vsel %vm272, %v242, 0
  %v295 = vsel %vm272, %v243, 0
  %v298 = vsel %vm272, %v244, 0
  %v301 = vsel %vm272, %v245, 0
  %v304 = vsel %vm272, %v246, 0
  %v307 = vsel %vm272, %v247, 0
  %v310 = vsel %vm272, %v248, 0
  %v313 = vsel %vm272, %v249, 0
  %v316 = vsel %vm272, %v250, 0
  %v319 = vsel %vm272, %v251, 0
  %v322 = vsel %vm272, %v252, 0
  %v325 = vsel %vm272, %v253, 0
  %v328 = vsel %vm272, %v254, 0
  %v331 = vsel %vm272, %v255, 0
  %v334 = vsel %vm272, %v256, 0
  %v337 = vsel %vm272, %v257, 0
  %v340 = vsel %vm272, %v258, 0
  %v343 = vsel %vm272, %v259, 0
  %v346 = vsel %vm272, %v260, 0
  %v349 = vsel %vm272, %v261, 0
  %v352 = vsel %vm272, %v262, 0
  %v355 = vsel %vm272, %v263, 0
  %v358 = vsel %vm272, %v264, 0
  %v361 = vsel %vm272, %v265, 0
  %v364 = vsel %vm272, %v266, 0
  %v367 = vsel %vm272, %v267, 0
  %369 = vmatpush.msra.mxu0 0.0
  %370 = vmatpush.msra.mxu0 0.0
  %371 = vmatpush.msra.mxu0 0.0
  %372 = vmatpush.msra.mxu0 0.0
  %373 = vmatpush.msra.mxu0 0.0
  %374 = vmatpush.msra.mxu0 0.0
  %375 = vmatpush.msra.mxu0 0.0
  %376 = vmatpush.msra.mxu0 0.0
  %377 = vmatpush.msra.mxu0 0.0
  %378 = vmatpush.msra.mxu0 0.0
  %379 = vmatpush.msra.mxu0 0.0
  %380 = vmatpush.msra.mxu0 0.0
  %381 = vmatpush.msra.mxu0 %v271
  %382 = vmatpush.msra.mxu0 %v270
  %383 = vmatpush.msra.mxu0 %v269
  %384 = vmatpush.msra.mxu0 %v268
  %385 = vmatmul.f32.gmra.mxu0 %v274
  %v386 = vpop.f32.mrf.mxu0
  %v387 = vadd.f32 0.0, %v386
  %388 = vmatmul.f32.gmra.mxu0 %v277
  %v389 = vpop.f32.mrf.mxu0
  %v390 = vadd.f32 0.0, %v389
  %391 = vmatmul.f32.gmra.mxu0 %v280
  %v392 = vpop.f32.mrf.mxu0
  %v393 = vadd.f32 0.0, %v392
  %394 = vmatmul.f32.gmra.mxu0 %v283
  %v395 = vpop.f32.mrf.mxu0
  %v396 = vadd.f32 0.0, %v395
  %397 = vmatmul.f32.gmra.mxu0 %v286
  %v398 = vpop.f32.mrf.mxu0
  %v399 = vadd.f32 0.0, %v398
  %400 = vmatmul.f32.gmra.mxu0 %v289
  %v401 = vpop.f32.mrf.mxu0
  %v402 = vadd.f32 0.0, %v401
  %403 = vmatmul.f32.gmra.mxu0 %v292
  %v404 = vpop.f32.mrf.mxu0
  %v405 = vadd.f32 0.0, %v404
  %406 = vmatmul.f32.gmra.mxu0 %v295
  %v407 = vpop.f32.mrf.mxu0
  %v408 = vadd.f32 0.0, %v407
  %409 = vmatmul.f32.gmra.mxu0 %v298
  %v410 = vpop.f32.mrf.mxu0
  %v411 = vadd.f32 0.0, %v410
  %412 = vmatmul.f32.gmra.mxu0 %v301
  %v413 = vpop.f32.mrf.mxu0
  %v414 = vadd.f32 0.0, %v413
  %415 = vmatmul.f32.gmra.mxu0 %v304
  %v416 = vpop.f32.mrf.mxu0
  %v417 = vadd.f32 0.0, %v416
  %418 = vmatmul.f32.gmra.mxu0 %v307
  %v419 = vpop.f32.mrf.mxu0
  %v420 = vadd.f32 0.0, %v419
  %421 = vmatmul.f32.gmra.mxu0 %v310
  %v422 = vpop.f32.mrf.mxu0
  %v423 = vadd.f32 0.0, %v422
  %424 = vmatmul.f32.gmra.mxu0 %v313
  %v425 = vpop.f32.mrf.mxu0
  %v426 = vadd.f32 0.0, %v425
  %427 = vmatmul.f32.gmra.mxu0 %v316
  %v428 = vpop.f32.mrf.mxu0
  %v429 = vadd.f32 0.0, %v428
  %430 = vmatmul.f32.gmra.mxu0 %v319
  %v431 = vpop.f32.mrf.mxu0
  %v432 = vadd.f32 0.0, %v431
  %433 = vmatmul.f32.gmra.mxu0 %v322
  %v434 = vpop.f32.mrf.mxu0
  %v435 = vadd.f32 0.0, %v434
  %436 = vmatmul.f32.gmra.mxu0 %v325
  %v437 = vpop.f32.mrf.mxu0
  %v438 = vadd.f32 0.0, %v437
  %439 = vmatmul.f32.gmra.mxu0 %v328
  %v440 = vpop.f32.mrf.mxu0
  %v441 = vadd.f32 0.0, %v440
  %442 = vmatmul.f32.gmra.mxu0 %v331
  %v443 = vpop.f32.mrf.mxu0
  %v444 = vadd.f32 0.0, %v443
  %445 = vmatmul.f32.gmra.mxu0 %v334
  %v446 = vpop.f32.mrf.mxu0
  %v447 = vadd.f32 0.0, %v446
  %448 = vmatmul.f32.gmra.mxu0 %v337
  %v449 = vpop.f32.mrf.mxu0
  %v450 = vadd.f32 0.0, %v449
  %451 = vmatmul.f32.gmra.mxu0 %v340
  %v452 = vpop.f32.mrf.mxu0
  %v453 = vadd.f32 0.0, %v452
  %454 = vmatmul.f32.gmra.mxu0 %v343
  %v455 = vpop.f32.mrf.mxu0
  %v456 = vadd.f32 0.0, %v455
  %457 = vmatmul.f32.gmra.mxu0 %v346
  %v458 = vpop.f32.mrf.mxu0
  %v459 = vadd.f32 0.0, %v458
  %460 = vmatmul.f32.gmra.mxu0 %v349
  %v461 = vpop.f32.mrf.mxu0
  %v462 = vadd.f32 0.0, %v461
  %463 = vmatmul.f32.gmra.mxu0 %v352
  %v464 = vpop.f32.mrf.mxu0
  %v465 = vadd.f32 0.0, %v464
  %466 = vmatmul.f32.gmra.mxu0 %v355
  %v467 = vpop.f32.mrf.mxu0
  %v468 = vadd.f32 0.0, %v467
  %469 = vmatmul.f32.gmra.mxu0 %v358
  %v470 = vpop.f32.mrf.mxu0
  %v471 = vadd.f32 0.0, %v470
  %472 = vmatmul.f32.gmra.mxu0 %v361
  %v473 = vpop.f32.mrf.mxu0
  %v474 = vadd.f32 0.0, %v473
  %475 = vmatmul.f32.gmra.mxu0 %v364
  %v476 = vpop.f32.mrf.mxu0
  %v477 = vadd.f32 0.0, %v476
  %478 = vmatmul.f32.gmra.mxu0 %v367
  %v479 = vpop.f32.mrf.mxu0
  %v480 = vadd.f32 0.0, %v479
  %481 = vdwg.mxu0
  %v482 = vld [vmem:[%s0] sm:$0xff]
  %v483 = vld [vmem:[%s0 + $0x8] sm:$0xff]
  %v484 = vld [vmem:[%s0 + $0x10] sm:$0xff]
  %v485 = vld [vmem:[%s0 + $0x18] sm:$0xff]
  %v486 = vld [vmem:[%s0 + $0x20] sm:$0xff]
  %v487 = vld [vmem:[%s0 + $0x28] sm:$0xff]
  %v488 = vld [vmem:[%s0 + $0x30] sm:$0xff]
  %v489 = vld [vmem:[%s0 + $0x38] sm:$0xff]
  %v490 = vld [vmem:[%s0 + $0x40] sm:$0xff]
  %v491 = vld [vmem:[%s0 + $0x48] sm:$0xff]
  %v492 = vld [vmem:[%s0 + $0x50] sm:$0xff]
  %v493 = vld [vmem:[%s0 + $0x58] sm:$0xff]
  %v494 = vld [vmem:[%s0 + $0x60] sm:$0xff]
  %v495 = vld [vmem:[%s0 + $0x68] sm:$0xff]
  %v496 = vld [vmem:[%s0 + $0x70] sm:$0xff]
  %v497 = vld [vmem:[%s0 + $0x78] sm:$0xff]
  %v498 = vld [vmem:[%s0 + $0x80] sm:$0xff]
  %v499 = vld [vmem:[%s0 + $0x88] sm:$0xff]
  %v500 = vld [vmem:[%s0 + $0x90] sm:$0xff]
  %v501 = vld [vmem:[%s0 + $0x98] sm:$0xff]
  %v502 = vld [vmem:[%s0 + $0xa0] sm:$0xff]
  %v503 = vld [vmem:[%s0 + $0xa8] sm:$0xff]
  %v504 = vld [vmem:[%s0 + $0xb0] sm:$0xff]
  %v505 = vld [vmem:[%s0 + $0xb8] sm:$0xff]
  %v506 = vld [vmem:[%s0 + $0xc0] sm:$0xff]
  %v507 = vld [vmem:[%s0 + $0xc8] sm:$0xff]
  %v508 = vld [vmem:[%s0 + $0xd0] sm:$0xff]
  %v509 = vld [vmem:[%s0 + $0xd8] sm:$0xff]
  %v510 = vld [vmem:[%s0 + $0xe0] sm:$0xff]
  %v511 = vld [vmem:[%s0 + $0xe8] sm:$0xff]
  %v512 = vld [vmem:[%s0 + $0xf0] sm:$0xff]
  %v513 = vld [vmem:[%s0 + $0xf8] sm:$0xff]
  %v514 = vld [vmem:[%s2] sm:$0xff]
  %v515 = vld [vmem:[%s2 + $0x8] sm:$0xff]
  %v516 = vld [vmem:[%s2 + $0x10] sm:$0xff]
  %v517 = vld [vmem:[%s2 + $0x18] sm:$0xff]
  %v518 = vld [vmem:[%s2 + $0x20] sm:$0xff]
  %v519 = vld [vmem:[%s2 + $0x28] sm:$0xff]
  %v520 = vld [vmem:[%s2 + $0x30] sm:$0xff]
  %v521 = vld [vmem:[%s2 + $0x38] sm:$0xff]
  %v522 = vld [vmem:[%s2 + $0x40] sm:$0xff]
  %v523 = vld [vmem:[%s2 + $0x48] sm:$0xff]
  %v524 = vld [vmem:[%s2 + $0x50] sm:$0xff]
  %v525 = vld [vmem:[%s2 + $0x58] sm:$0xff]
  %v526 = vld [vmem:[%s2 + $0x60] sm:$0xff]
  %v527 = vld [vmem:[%s2 + $0x68] sm:$0xff]
  %v528 = vld [vmem:[%s2 + $0x70] sm:$0xff]
  %v529 = vld [vmem:[%s2 + $0x78] sm:$0xff]
  %v530 = vld [vmem:[%s2 + $0x80] sm:$0xff]
  %v531 = vld [vmem:[%s2 + $0x88] sm:$0xff]
  %v532 = vld [vmem:[%s2 + $0x90] sm:$0xff]
  %v533 = vld [vmem:[%s2 + $0x98] sm:$0xff]
  %v534 = vld [vmem:[%s2 + $0xa0] sm:$0xff]
  %v535 = vld [vmem:[%s2 + $0xa8] sm:$0xff]
  %v536 = vld [vmem:[%s2 + $0xb0] sm:$0xff]
  %v537 = vld [vmem:[%s2 + $0xb8] sm:$0xff]
  %v538 = vld [vmem:[%s2 + $0xc0] sm:$0xff]
  %v539 = vld [vmem:[%s2 + $0xc8] sm:$0xff]
  %v540 = vld [vmem:[%s2 + $0xd0] sm:$0xff]
  %v541 = vld [vmem:[%s2 + $0xd8] sm:$0xff]
  %v542 = vld [vmem:[%s2 + $0xe0] sm:$0xff]
  %v543 = vld [vmem:[%s2 + $0xe8] sm:$0xff]
  %v544 = vld [vmem:[%s2 + $0xf0] sm:$0xff]
  %v545 = vld [vmem:[%s2 + $0xf8] sm:$0xff]
  %v546 = vld [vmem:[%s5] sm:$0xf]
  %v547 = vld [vmem:[%s5 + $0x4] sm:$0xf]
  %v548 = vld [vmem:[%s5 + $0x8] sm:$0xf]
  %v549 = vld [vmem:[%s5 + $0xc] sm:$0xf]
  %v550 = vld [vmem:[%s7] sm:$0x1]
  %v551 = vld [vmem:[%s7 + $0x1] sm:$0x1]
  %v552 = vld [vmem:[%s7 + $0x2] sm:$0x1]
  %v553 = vpack.c.bf16 %v390, %v387
  %v554 = vpack.c.bf16 %v396, %v393
  %v555 = vpack.c.bf16 %v402, %v399
  %v556 = vpack.c.bf16 %v408, %v405
  %v557 = vpack.c.bf16 %v414, %v411
  %v558 = vpack.c.bf16 %v420, %v417
  %v559 = vpack.c.bf16 %v426, %v423
  %v560 = vpack.c.bf16 %v432, %v429
  %v561 = vpack.c.bf16 %v438, %v435
  %v562 = vpack.c.bf16 %v444, %v441
  %v563 = vpack.c.bf16 %v450, %v447
  %v564 = vpack.c.bf16 %v456, %v453
  %v565 = vpack.c.bf16 %v462, %v459
  %v566 = vpack.c.bf16 %v468, %v465
  %v567 = vpack.c.bf16 %v474, %v471
  %v568 = vpack.c.bf16 %v480, %v477
  %v601 = vunpack.c.l.b16 %v482
  %v602 = vunpack.c.h.b16 %v482
  %v603 = vunpack.c.l.b16 %v483
  %v604 = vunpack.c.h.b16 %v483
  %v605 = vunpack.c.l.b16 %v484
  %v606 = vunpack.c.h.b16 %v484
  %v607 = vunpack.c.l.b16 %v485
  %v608 = vunpack.c.h.b16 %v485
  %v609 = vunpack.c.l.b16 %v486
  %v610 = vunpack.c.h.b16 %v486
  %v611 = vunpack.c.l.b16 %v487
  %v612 = vunpack.c.h.b16 %v487
  %v613 = vunpack.c.l.b16 %v488
  %v614 = vunpack.c.h.b16 %v488
  %v615 = vunpack.c.l.b16 %v489
  %v616 = vunpack.c.h.b16 %v489
  %v617 = vunpack.c.l.b16 %v490
  %v618 = vunpack.c.h.b16 %v490
  %v619 = vunpack.c.l.b16 %v491
  %v620 = vunpack.c.h.b16 %v491
  %v621 = vunpack.c.l.b16 %v492
  %v622 = vunpack.c.h.b16 %v492
  %v623 = vunpack.c.l.b16 %v493
  %v624 = vunpack.c.h.b16 %v493
  %v625 = vunpack.c.l.b16 %v494
  %v626 = vunpack.c.h.b16 %v494
  %v627 = vunpack.c.l.b16 %v495
  %v628 = vunpack.c.h.b16 %v495
  %v629 = vunpack.c.l.b16 %v496
  %v630 = vunpack.c.h.b16 %v496
  %v631 = vunpack.c.l.b16 %v497
  %v632 = vunpack.c.h.b16 %v497
  %v633 = vunpack.c.l.b16 %v498
  %v634 = vunpack.c.h.b16 %v498
  %v635 = vunpack.c.l.b16 %v499
  %v636 = vunpack.c.h.b16 %v499
  %v637 = vunpack.c.l.b16 %v500
  %v638 = vunpack.c.h.b16 %v500
  %v639 = vunpack.c.l.b16 %v501
  %v640 = vunpack.c.h.b16 %v501
  %v641 = vunpack.c.l.b16 %v502
  %v642 = vunpack.c.h.b16 %v502
  %v643 = vunpack.c.l.b16 %v503
  %v644 = vunpack.c.h.b16 %v503
  %v645 = vunpack.c.l.b16 %v504
  %v646 = vunpack.c.h.b16 %v504
  %v647 = vunpack.c.l.b16 %v505
  %v648 = vunpack.c.h.b16 %v505
  %v649 = vunpack.c.l.b16 %v506
  %v650 = vunpack.c.h.b16 %v506
  %v651 = vunpack.c.l.b16 %v507
  %v652 = vunpack.c.h.b16 %v507
  %v653 = vunpack.c.l.b16 %v508
  %v654 = vunpack.c.h.b16 %v508
  %v655 = vunpack.c.l.b16 %v509
  %v656 = vunpack.c.h.b16 %v509
  %v657 = vunpack.c.l.b16 %v510
  %v658 = vunpack.c.h.b16 %v510
  %v659 = vunpack.c.l.b16 %v511
  %v660 = vunpack.c.h.b16 %v511
  %v661 = vunpack.c.l.b16 %v512
  %v662 = vunpack.c.h.b16 %v512
  %v663 = vunpack.c.l.b16 %v513
  %v664 = vunpack.c.h.b16 %v513
  %v665 = vpack.c.b16 %v603, %v601
  %v666 = vpack.c.b16 %v604, %v602
  %v667 = vpack.c.b16 %v607, %v605
  %v668 = vpack.c.b16 %v608, %v606
  %v669 = vpack.c.b16 %v611, %v609
  %v670 = vpack.c.b16 %v612, %v610
  %v671 = vpack.c.b16 %v615, %v613
  %v672 = vpack.c.b16 %v616, %v614
  %v673 = vpack.c.b16 %v619, %v617
  %v674 = vpack.c.b16 %v620, %v618
  %v675 = vpack.c.b16 %v623, %v621
  %v676 = vpack.c.b16 %v624, %v622
  %v677 = vpack.c.b16 %v627, %v625
  %v678 = vpack.c.b16 %v628, %v626
  %v679 = vpack.c.b16 %v631, %v629
  %v680 = vpack.c.b16 %v632, %v630
  %v681 = vpack.c.b16 %v635, %v633
  %v682 = vpack.c.b16 %v636, %v634
  %v683 = vpack.c.b16 %v639, %v637
  %v684 = vpack.c.b16 %v640, %v638
  %v685 = vpack.c.b16 %v643, %v641
  %v686 = vpack.c.b16 %v644, %v642
  %v687 = vpack.c.b16 %v647, %v645
  %v688 = vpack.c.b16 %v648, %v646
  %v689 = vpack.c.b16 %v651, %v649
  %v690 = vpack.c.b16 %v652, %v650
  %v691 = vpack.c.b16 %v655, %v653
  %v692 = vpack.c.b16 %v656, %v654
  %v693 = vpack.c.b16 %v659, %v657
  %v694 = vpack.c.b16 %v660, %v658
  %v695 = vpack.c.b16 %v663, %v661
  %v696 = vpack.c.b16 %v664, %v662
  %729 = vmatpush.bf16.msra.mxu0 %v560
  %730 = vmatpush.bf16.msra.mxu0 %v559
  %731 = vmatpush.bf16.msra.mxu0 %v558
  %732 = vmatpush.bf16.msra.mxu0 %v557
  %733 = vmatpush.bf16.msra.mxu0 %v556
  %734 = vmatpush.bf16.msra.mxu0 %v555
  %735 = vmatpush.bf16.msra.mxu0 %v554
  %736 = vmatpush.bf16.msra.mxu0 %v553
  %737 = vmatmul.bf16.gmra.mxu0 %v665
  %v738 = vpop.f32.mrf.mxu0
  %v739 = vadd.f32 0.0, %v738
  %v740 = vpop.f32.mrf.mxu0
  %v741 = vadd.f32 0.0, %v740
  %742 = vmatmul.bf16.gmra.mxu0 %v667
  %v743 = vpop.f32.mrf.mxu0
  %v744 = vadd.f32 0.0, %v743
  %v745 = vpop.f32.mrf.mxu0
  %v746 = vadd.f32 0.0, %v745
  %747 = vmatmul.bf16.gmra.mxu0 %v669
  %v748 = vpop.f32.mrf.mxu0
  %v749 = vadd.f32 0.0, %v748
  %v750 = vpop.f32.mrf.mxu0
  %v751 = vadd.f32 0.0, %v750
  %752 = vmatmul.bf16.gmra.mxu0 %v671
  %v753 = vpop.f32.mrf.mxu0
  %v754 = vadd.f32 0.0, %v753
  %v755 = vpop.f32.mrf.mxu0
  %v756 = vadd.f32 0.0, %v755
  %757 = vmatmul.bf16.gmra.mxu0 %v673
  %v758 = vpop.f32.mrf.mxu0
  %v759 = vadd.f32 0.0, %v758
  %v760 = vpop.f32.mrf.mxu0
  %v761 = vadd.f32 0.0, %v760
  %762 = vmatmul.bf16.gmra.mxu0 %v675
  %v763 = vpop.f32.mrf.mxu0
  %v764 = vadd.f32 0.0, %v763
  %v765 = vpop.f32.mrf.mxu0
  %v766 = vadd.f32 0.0, %v765
  %767 = vmatmul.bf16.gmra.mxu0 %v677
  %v768 = vpop.f32.mrf.mxu0
  %v769 = vadd.f32 0.0, %v768
  %v770 = vpop.f32.mrf.mxu0
  %v771 = vadd.f32 0.0, %v770
  %772 = vmatmul.bf16.gmra.mxu0 %v679
  %v773 = vpop.f32.mrf.mxu0
  %v774 = vadd.f32 0.0, %v773
  %v775 = vpop.f32.mrf.mxu0
  %v776 = vadd.f32 0.0, %v775
  %777 = vmatmul.bf16.gmra.mxu0 %v681
  %v778 = vpop.f32.mrf.mxu0
  %v779 = vadd.f32 0.0, %v778
  %v780 = vpop.f32.mrf.mxu0
  %v781 = vadd.f32 0.0, %v780
  %782 = vmatmul.bf16.gmra.mxu0 %v683
  %v783 = vpop.f32.mrf.mxu0
  %v784 = vadd.f32 0.0, %v783
  %v785 = vpop.f32.mrf.mxu0
  %v786 = vadd.f32 0.0, %v785
  %787 = vmatmul.bf16.gmra.mxu0 %v685
  %v788 = vpop.f32.mrf.mxu0
  %v789 = vadd.f32 0.0, %v788
  %v790 = vpop.f32.mrf.mxu0
  %v791 = vadd.f32 0.0, %v790
  %792 = vmatmul.bf16.gmra.mxu0 %v687
  %v793 = vpop.f32.mrf.mxu0
  %v794 = vadd.f32 0.0, %v793
  %v795 = vpop.f32.mrf.mxu0
  %v796 = vadd.f32 0.0, %v795
  %797 = vmatmul.bf16.gmra.mxu0 %v689
  %v798 = vpop.f32.mrf.mxu0
  %v799 = vadd.f32 0.0, %v798
  %v800 = vpop.f32.mrf.mxu0
  %v801 = vadd.f32 0.0, %v800
  %802 = vmatmul.bf16.gmra.mxu0 %v691
  %v803 = vpop.f32.mrf.mxu0
  %v804 = vadd.f32 0.0, %v803
  %v805 = vpop.f32.mrf.mxu0
  %v806 = vadd.f32 0.0, %v805
  %807 = vmatmul.bf16.gmra.mxu0 %v693
  %v808 = vpop.f32.mrf.mxu0
  %v809 = vadd.f32 0.0, %v808
  %v810 = vpop.f32.mrf.mxu0
  %v811 = vadd.f32 0.0, %v810
  %812 = vmatmul.bf16.gmra.mxu0 %v695
  %v813 = vpop.f32.mrf.mxu0
  %v814 = vadd.f32 0.0, %v813
  %v815 = vpop.f32.mrf.mxu0
  %v816 = vadd.f32 0.0, %v815
  %817 = vdwg.mxu0
  %818 = vmatpush.bf16.msra.mxu0 %v568
  %819 = vmatpush.bf16.msra.mxu0 %v567
  %820 = vmatpush.bf16.msra.mxu0 %v566
  %821 = vmatpush.bf16.msra.mxu0 %v565
  %822 = vmatpush.bf16.msra.mxu0 %v564
  %823 = vmatpush.bf16.msra.mxu0 %v563
  %824 = vmatpush.bf16.msra.mxu0 %v562
  %825 = vmatpush.bf16.msra.mxu0 %v561
  %826 = vmatmul.bf16.gmra.mxu0 %v666
  %v827 = vpop.f32.mrf.mxu0
  %v828 = vadd.f32 %v739, %v827
  %v829 = vpop.f32.mrf.mxu0
  %v830 = vadd.f32 %v741, %v829
  %831 = vmatmul.bf16.gmra.mxu0 %v668
  %v832 = vpop.f32.mrf.mxu0
  %v833 = vadd.f32 %v744, %v832
  %v834 = vpop.f32.mrf.mxu0
  %v835 = vadd.f32 %v746, %v834
  %836 = vmatmul.bf16.gmra.mxu0 %v670
  %v837 = vpop.f32.mrf.mxu0
  %v838 = vadd.f32 %v749, %v837
  %v839 = vpop.f32.mrf.mxu0
  %v840 = vadd.f32 %v751, %v839
  %841 = vmatmul.bf16.gmra.mxu0 %v672
  %v842 = vpop.f32.mrf.mxu0
  %v843 = vadd.f32 %v754, %v842
  %v844 = vpop.f32.mrf.mxu0
  %v845 = vadd.f32 %v756, %v844
  %846 = vmatmul.bf16.gmra.mxu0 %v674
  %v847 = vpop.f32.mrf.mxu0
  %v848 = vadd.f32 %v759, %v847
  %v849 = vpop.f32.mrf.mxu0
  %v850 = vadd.f32 %v761, %v849
  %851 = vmatmul.bf16.gmra.mxu0 %v676
  %v852 = vpop.f32.mrf.mxu0
  %v853 = vadd.f32 %v764, %v852
  %v854 = vpop.f32.mrf.mxu0
  %v855 = vadd.f32 %v766, %v854
  %856 = vmatmul.bf16.gmra.mxu0 %v678
  %v857 = vpop.f32.mrf.mxu0
  %v858 = vadd.f32 %v769, %v857
  %v859 = vpop.f32.mrf.mxu0
  %v860 = vadd.f32 %v771, %v859
  %861 = vmatmul.bf16.gmra.mxu0 %v680
  %v862 = vpop.f32.mrf.mxu0
  %v863 = vadd.f32 %v774, %v862
  %v864 = vpop.f32.mrf.mxu0
  %v865 = vadd.f32 %v776, %v864
  %866 = vmatmul.bf16.gmra.mxu0 %v682
  %v867 = vpop.f32.mrf.mxu0
  %v868 = vadd.f32 %v779, %v867
  %v869 = vpop.f32.mrf.mxu0
  %v870 = vadd.f32 %v781, %v869
  %871 = vmatmul.bf16.gmra.mxu0 %v684
  %v872 = vpop.f32.mrf.mxu0
  %v873 = vadd.f32 %v784, %v872
  %v874 = vpop.f32.mrf.mxu0
  %v875 = vadd.f32 %v786, %v874
  %876 = vmatmul.bf16.gmra.mxu0 %v686
  %v877 = vpop.f32.mrf.mxu0
  %v878 = vadd.f32 %v789, %v877
  %v879 = vpop.f32.mrf.mxu0
  %v880 = vadd.f32 %v791, %v879
  %881 = vmatmul.bf16.gmra.mxu0 %v688
  %v882 = vpop.f32.mrf.mxu0
  %v883 = vadd.f32 %v794, %v882
  %v884 = vpop.f32.mrf.mxu0
  %v885 = vadd.f32 %v796, %v884
  %886 = vmatmul.bf16.gmra.mxu0 %v690
  %v887 = vpop.f32.mrf.mxu0
  %v888 = vadd.f32 %v799, %v887
  %v889 = vpop.f32.mrf.mxu0
  %v890 = vadd.f32 %v801, %v889
  %891 = vmatmul.bf16.gmra.mxu0 %v692
  %v892 = vpop.f32.mrf.mxu0
  %v893 = vadd.f32 %v804, %v892
  %v894 = vpop.f32.mrf.mxu0
  %v895 = vadd.f32 %v806, %v894
  %896 = vmatmul.bf16.gmra.mxu0 %v694
  %v897 = vpop.f32.mrf.mxu0
  %v898 = vadd.f32 %v809, %v897
  %v899 = vpop.f32.mrf.mxu0
  %v900 = vadd.f32 %v811, %v899
  %901 = vmatmul.bf16.gmra.mxu0 %v696
  %v902 = vpop.f32.mrf.mxu0
  %v903 = vadd.f32 %v814, %v902
  %v904 = vpop.f32.mrf.mxu0
  %v905 = vadd.f32 %v816, %v904
  %906 = vdwg.mxu0
  %v907 = vpack.c.bf16 %v830, %v828
  %v908 = vpack.c.bf16 %v835, %v833
  %v909 = vpack.c.bf16 %v840, %v838
  %v910 = vpack.c.bf16 %v845, %v843
  %v911 = vpack.c.bf16 %v850, %v848
  %v912 = vpack.c.bf16 %v855, %v853
  %v913 = vpack.c.bf16 %v860, %v858
  %v914 = vpack.c.bf16 %v865, %v863
  %v915 = vpack.c.bf16 %v870, %v868
  %v916 = vpack.c.bf16 %v875, %v873
  %v917 = vpack.c.bf16 %v880, %v878
  %v918 = vpack.c.bf16 %v885, %v883
  %v919 = vpack.c.bf16 %v890, %v888
  %v920 = vpack.c.bf16 %v895, %v893
  %v921 = vpack.c.bf16 %v900, %v898
  %v922 = vpack.c.bf16 %v905, %v903
  %v923 = vperm.slane %v550, 0
  %v928 = vunpack.c.l.b16 %v546
  %v929 = vunpack.c.l.b16 %v547
  %v930 = vunpack.c.l.b16 %v548
  %v931 = vunpack.c.l.b16 %v549
  %v932 = vpack.c.b16 %v929, %v928
  %v933 = vpack.c.b16 %v931, %v930
  %v937 = vsel %vm272, %v907, 0
  %v940 = vsel %vm272, %v908, 0
  %v943 = vsel %vm272, %v909, 0
  %v946 = vsel %vm272, %v910, 0
  %v949 = vsel %vm272, %v911, 0
  %v952 = vsel %vm272, %v912, 0
  %v955 = vsel %vm272, %v913, 0
  %v958 = vsel %vm272, %v914, 0
  %v961 = vsel %vm272, %v915, 0
  %v964 = vsel %vm272, %v916, 0
  %v967 = vsel %vm272, %v917, 0
  %v970 = vsel %vm272, %v918, 0
  %v973 = vsel %vm272, %v919, 0
  %v976 = vsel %vm272, %v920, 0
  %v979 = vsel %vm272, %v921, 0
  %v982 = vsel %vm272, %v922, 0
  %984 = vmatpush.bf16.msra.mxu0 0
  %985 = vmatpush.bf16.msra.mxu0 0
  %986 = vmatpush.bf16.msra.mxu0 0
  %987 = vmatpush.bf16.msra.mxu0 0
  %988 = vmatpush.bf16.msra.mxu0 0
  %989 = vmatpush.bf16.msra.mxu0 0
  %990 = vmatpush.bf16.msra.mxu0 %v933
  %991 = vmatpush.bf16.msra.mxu0 %v932
  %992 = vmatmul.bf16.gmra.mxu0 %v937
  %v993 = vpop.f32.mrf.mxu0
  %v994 = vadd.f32 %v923, %v993
  %v995 = vpop.f32.mrf.mxu0
  %v996 = vadd.f32 %v923, %v995
  %997 = vmatmul.bf16.gmra.mxu0 %v940
  %v998 = vpop.f32.mrf.mxu0
  %v999 = vadd.f32 %v923, %v998
  %v1000 = vpop.f32.mrf.mxu0
  %v1001 = vadd.f32 %v923, %v1000
  %1002 = vmatmul.bf16.gmra.mxu0 %v943
  %v1003 = vpop.f32.mrf.mxu0
  %v1004 = vadd.f32 %v923, %v1003
  %v1005 = vpop.f32.mrf.mxu0
  %v1006 = vadd.f32 %v923, %v1005
  %1007 = vmatmul.bf16.gmra.mxu0 %v946
  %v1008 = vpop.f32.mrf.mxu0
  %v1009 = vadd.f32 %v923, %v1008
  %v1010 = vpop.f32.mrf.mxu0
  %v1011 = vadd.f32 %v923, %v1010
  %1012 = vmatmul.bf16.gmra.mxu0 %v949
  %v1013 = vpop.f32.mrf.mxu0
  %v1014 = vadd.f32 %v923, %v1013
  %v1015 = vpop.f32.mrf.mxu0
  %v1016 = vadd.f32 %v923, %v1015
  %1017 = vmatmul.bf16.gmra.mxu0 %v952
  %v1018 = vpop.f32.mrf.mxu0
  %v1019 = vadd.f32 %v923, %v1018
  %v1020 = vpop.f32.mrf.mxu0
  %v1021 = vadd.f32 %v923, %v1020
  %1022 = vmatmul.bf16.gmra.mxu0 %v955
  %v1023 = vpop.f32.mrf.mxu0
  %v1024 = vadd.f32 %v923, %v1023
  %v1025 = vpop.f32.mrf.mxu0
  %v1026 = vadd.f32 %v923, %v1025
  %1027 = vmatmul.bf16.gmra.mxu0 %v958
  %v1028 = vpop.f32.mrf.mxu0
  %v1029 = vadd.f32 %v923, %v1028
  %v1030 = vpop.f32.mrf.mxu0
  %v1031 = vadd.f32 %v923, %v1030
  %1032 = vmatmul.bf16.gmra.mxu0 %v961
  %v1033 = vpop.f32.mrf.mxu0
  %v1034 = vadd.f32 %v923, %v1033
  %v1035 = vpop.f32.mrf.mxu0
  %v1036 = vadd.f32 %v923, %v1035
  %1037 = vmatmul.bf16.gmra.mxu0 %v964
  %v1038 = vpop.f32.mrf.mxu0
  %v1039 = vadd.f32 %v923, %v1038
  %v1040 = vpop.f32.mrf.mxu0
  %v1041 = vadd.f32 %v923, %v1040
  %1042 = vmatmul.bf16.gmra.mxu0 %v967
  %v1043 = vpop.f32.mrf.mxu0
  %v1044 = vadd.f32 %v923, %v1043
  %v1045 = vpop.f32.mrf.mxu0
  %v1046 = vadd.f32 %v923, %v1045
  %1047 = vmatmul.bf16.gmra.mxu0 %v970
  %v1048 = vpop.f32.mrf.mxu0
  %v1049 = vadd.f32 %v923, %v1048
  %v1050 = vpop.f32.mrf.mxu0
  %v1051 = vadd.f32 %v923, %v1050
  %1052 = vmatmul.bf16.gmra.mxu0 %v973
  %v1053 = vpop.f32.mrf.mxu0
  %v1054 = vadd.f32 %v923, %v1053
  %v1055 = vpop.f32.mrf.mxu0
  %v1056 = vadd.f32 %v923, %v1055
  %1057 = vmatmul.bf16.gmra.mxu0 %v976
  %v1058 = vpop.f32.mrf.mxu0
  %v1059 = vadd.f32 %v923, %v1058
  %v1060 = vpop.f32.mrf.mxu0
  %v1061 = vadd.f32 %v923, %v1060
  %1062 = vmatmul.bf16.gmra.mxu0 %v979
  %v1063 = vpop.f32.mrf.mxu0
  %v1064 = vadd.f32 %v923, %v1063
  %v1065 = vpop.f32.mrf.mxu0
  %v1066 = vadd.f32 %v923, %v1065
  %1067 = vmatmul.bf16.gmra.mxu0 %v982
  %v1068 = vpop.f32.mrf.mxu0
  %v1069 = vadd.f32 %v923, %v1068
  %v1070 = vpop.f32.mrf.mxu0
  %v1071 = vadd.f32 %v923, %v1070
  %1072 = vdwg.mxu0
  %1074 = vset.pattern.permute.xlu0 0
  %1075 = vperm.xlu0 %1074, %v514
  %v1076 = vpop.permute.xlu0 %1075
  %1079 = vset.pattern.permute.xlu0 0
  %1080 = vperm.xlu0 %1079, %v515
  %v1081 = vpop.permute.xlu0 %1080
  %1084 = vset.pattern.permute.xlu0 0
  %1085 = vperm.xlu0 %1084, %v516
  %v1086 = vpop.permute.xlu0 %1085
  %1089 = vset.pattern.permute.xlu0 0
  %1090 = vperm.xlu0 %1089, %v517
  %v1091 = vpop.permute.xlu0 %1090
  %1094 = vset.pattern.permute.xlu0 0
  %1095 = vperm.xlu0 %1094, %v518
  %v1096 = vpop.permute.xlu0 %1095
  %1099 = vset.pattern.permute.xlu0 0
  %1100 = vperm.xlu0 %1099, %v519
  %v1101 = vpop.permute.xlu0 %1100
  %1104 = vset.pattern.permute.xlu0 0
  %1105 = vperm.xlu0 %1104, %v520
  %v1106 = vpop.permute.xlu0 %1105
  %1109 = vset.pattern.permute.xlu0 0
  %1110 = vperm.xlu0 %1109, %v521
  %v1111 = vpop.permute.xlu0 %1110
  %1114 = vset.pattern.permute.xlu0 0
  %1115 = vperm.xlu0 %1114, %v522
  %v1116 = vpop.permute.xlu0 %1115
  %1119 = vset.pattern.permute.xlu0 0
  %1120 = vperm.xlu0 %1119, %v523
  %v1121 = vpop.permute.xlu0 %1120
  %1124 = vset.pattern.permute.xlu0 0
  %1125 = vperm.xlu0 %1124, %v524
  %v1126 = vpop.permute.xlu0 %1125
  %1129 = vset.pattern.permute.xlu0 0
  %1130 = vperm.xlu0 %1129, %v525
  %v1131 = vpop.permute.xlu0 %1130
  %1134 = vset.pattern.permute.xlu0 0
  %1135 = vperm.xlu0 %1134, %v526
  %v1136 = vpop.permute.xlu0 %1135
  %1139 = vset.pattern.permute.xlu0 0
  %1140 = vperm.xlu0 %1139, %v527
  %v1141 = vpop.permute.xlu0 %1140
  %1144 = vset.pattern.permute.xlu0 0
  %1145 = vperm.xlu0 %1144, %v528
  %v1146 = vpop.permute.xlu0 %1145
  %1149 = vset.pattern.permute.xlu0 0
  %1150 = vperm.xlu0 %1149, %v529
  %v1151 = vpop.permute.xlu0 %1150
  %1154 = vset.pattern.permute.xlu0 0
  %1155 = vperm.xlu0 %1154, %v530
  %v1156 = vpop.permute.xlu0 %1155
  %1159 = vset.pattern.permute.xlu0 0
  %1160 = vperm.xlu0 %1159, %v531
  %v1161 = vpop.permute.xlu0 %1160
  %1164 = vset.pattern.permute.xlu0 0
  %1165 = vperm.xlu0 %1164, %v532
  %v1166 = vpop.permute.xlu0 %1165
  %1169 = vset.pattern.permute.xlu0 0
  %1170 = vperm.xlu0 %1169, %v533
  %v1171 = vpop.permute.xlu0 %1170
  %1174 = vset.pattern.permute.xlu0 0
  %1175 = vperm.xlu0 %1174, %v534
  %v1176 = vpop.permute.xlu0 %1175
  %1179 = vset.pattern.permute.xlu0 0
  %1180 = vperm.xlu0 %1179, %v535
  %v1181 = vpop.permute.xlu0 %1180
  %1184 = vset.pattern.permute.xlu0 0
  %1185 = vperm.xlu0 %1184, %v536
  %v1186 = vpop.permute.xlu0 %1185
  %1189 = vset.pattern.permute.xlu0 0
  %1190 = vperm.xlu0 %1189, %v537
  %v1191 = vpop.permute.xlu0 %1190
  %1194 = vset.pattern.permute.xlu0 0
  %1195 = vperm.xlu0 %1194, %v538
  %v1196 = vpop.permute.xlu0 %1195
  %1199 = vset.pattern.permute.xlu0 0
  %1200 = vperm.xlu0 %1199, %v539
  %v1201 = vpop.permute.xlu0 %1200
  %1204 = vset.pattern.permute.xlu0 0
  %1205 = vperm.xlu0 %1204, %v540
  %v1206 = vpop.permute.xlu0 %1205
  %1209 = vset.pattern.permute.xlu0 0
  %1210 = vperm.xlu0 %1209, %v541
  %v1211 = vpop.permute.xlu0 %1210
  %1214 = vset.pattern.permute.xlu0 0
  %1215 = vperm.xlu0 %1214, %v542
  %v1216 = vpop.permute.xlu0 %1215
  %1219 = vset.pattern.permute.xlu0 0
  %1220 = vperm.xlu0 %1219, %v543
  %v1221 = vpop.permute.xlu0 %1220
  %1224 = vset.pattern.permute.xlu0 0
  %1225 = vperm.xlu0 %1224, %v544
  %v1226 = vpop.permute.xlu0 %1225
  %1229 = vset.pattern.permute.xlu0 0
  %1230 = vperm.xlu0 %1229, %v545
  %v1231 = vpop.permute.xlu0 %1230
  %v1233 = vmul.f32 %v994, %v1076
  %v1234 = vmul.f32 %v996, %v1081
  %v1235 = vmul.f32 %v999, %v1086
  %v1236 = vmul.f32 %v1001, %v1091
  %v1237 = vmul.f32 %v1004, %v1096
  %v1238 = vmul.f32 %v1006, %v1101
  %v1239 = vmul.f32 %v1009, %v1106
  %v1240 = vmul.f32 %v1011, %v1111
  %v1241 = vmul.f32 %v1014, %v1116
  %v1242 = vmul.f32 %v1016, %v1121
  %v1243 = vmul.f32 %v1019, %v1126
  %v1244 = vmul.f32 %v1021, %v1131
  %v1245 = vmul.f32 %v1024, %v1136
  %v1246 = vmul.f32 %v1026, %v1141
  %v1247 = vmul.f32 %v1029, %v1146
  %v1248 = vmul.f32 %v1031, %v1151
  %v1249 = vmul.f32 %v1034, %v1156
  %v1250 = vmul.f32 %v1036, %v1161
  %v1251 = vmul.f32 %v1039, %v1166
  %v1252 = vmul.f32 %v1041, %v1171
  %v1253 = vmul.f32 %v1044, %v1176
  %v1254 = vmul.f32 %v1046, %v1181
  %v1255 = vmul.f32 %v1049, %v1186
  %v1256 = vmul.f32 %v1051, %v1191
  %v1257 = vmul.f32 %v1054, %v1196
  %v1258 = vmul.f32 %v1056, %v1201
  %v1259 = vmul.f32 %v1059, %v1206
  %v1260 = vmul.f32 %v1061, %v1211
  %v1261 = vmul.f32 %v1064, %v1216
  %v1262 = vmul.f32 %v1066, %v1221
  %v1263 = vmul.f32 %v1069, %v1226
  %v1264 = vmul.f32 %v1071, %v1231
  %v1265 = vsel %vm272, %v1233, 0.0
  %v1266 = vsel %vm272, %v1234, 0.0
  %v1267 = vadd.f32 %v1265, %v1266
  %v1268 = vsel %vm272, %v1235, 0.0
  %v1269 = vadd.f32 %v1267, %v1268
  %v1270 = vsel %vm272, %v1236, 0.0
  %v1271 = vadd.f32 %v1269, %v1270
  %v1272 = vsel %vm272, %v1237, 0.0
  %v1273 = vadd.f32 %v1271, %v1272
  %v1274 = vsel %vm272, %v1238, 0.0
  %v1275 = vadd.f32 %v1273, %v1274
  %v1276 = vsel %vm272, %v1239, 0.0
  %v1277 = vadd.f32 %v1275, %v1276
  %v1278 = vsel %vm272, %v1240, 0.0
  %v1279 = vadd.f32 %v1277, %v1278
  %v1280 = vsel %vm272, %v1241, 0.0
  %v1281 = vadd.f32 %v1279, %v1280
  %v1282 = vsel %vm272, %v1242, 0.0
  %v1283 = vadd.f32 %v1281, %v1282
  %v1284 = vsel %vm272, %v1243, 0.0
  %v1285 = vadd.f32 %v1283, %v1284
  %v1286 = vsel %vm272, %v1244, 0.0
  %v1287 = vadd.f32 %v1285, %v1286
  %v1288 = vsel %vm272, %v1245, 0.0
  %v1289 = vadd.f32 %v1287, %v1288
  %v1290 = vsel %vm272, %v1246, 0.0
  %v1291 = vadd.f32 %v1289, %v1290
  %v1292 = vsel %vm272, %v1247, 0.0
  %v1293 = vadd.f32 %v1291, %v1292
  %v1294 = vsel %vm272, %v1248, 0.0
  %v1295 = vadd.f32 %v1293, %v1294
  %v1296 = vsel %vm272, %v1249, 0.0
  %v1297 = vadd.f32 %v1295, %v1296
  %v1298 = vsel %vm272, %v1250, 0.0
  %v1299 = vadd.f32 %v1297, %v1298
  %v1300 = vsel %vm272, %v1251, 0.0
  %v1301 = vadd.f32 %v1299, %v1300
  %v1302 = vsel %vm272, %v1252, 0.0
  %v1303 = vadd.f32 %v1301, %v1302
  %v1304 = vsel %vm272, %v1253, 0.0
  %v1305 = vadd.f32 %v1303, %v1304
  %v1306 = vsel %vm272, %v1254, 0.0
  %v1307 = vadd.f32 %v1305, %v1306
  %v1308 = vsel %vm272, %v1255, 0.0
  %v1309 = vadd.f32 %v1307, %v1308
  %v1310 = vsel %vm272, %v1256, 0.0
  %v1311 = vadd.f32 %v1309, %v1310
  %v1312 = vsel %vm272, %v1257, 0.0
  %v1313 = vadd.f32 %v1311, %v1312
  %v1314 = vsel %vm272, %v1258, 0.0
  %v1315 = vadd.f32 %v1313, %v1314
  %v1316 = vsel %vm272, %v1259, 0.0
  %v1317 = vadd.f32 %v1315, %v1316
  %v1318 = vsel %vm272, %v1260, 0.0
  %v1319 = vadd.f32 %v1317, %v1318
  %v1320 = vsel %vm272, %v1261, 0.0
  %v1321 = vadd.f32 %v1319, %v1320
  %v1322 = vsel %vm272, %v1262, 0.0
  %v1323 = vadd.f32 %v1321, %v1322
  %v1324 = vsel %vm272, %v1263, 0.0
  %v1325 = vadd.f32 %v1323, %v1324
  %v1326 = vsel %vm272, %v1264, 0.0
  %v1327 = vadd.f32 %v1325, %v1326
  %v1328 = vrot.slane %v1327, 4
  %v1329 = vadd.f32 %v1327, %v1328
  %v1330 = vrot.slane %v1329, 2
  %v1331 = vadd.f32 %v1329, %v1330
  %v1332 = vrot.slane %v1331, 1
  %v1333 = vadd.f32 %v1331, %v1332
  %v1334 = vrcp.pop 256.0
  %v1335 = vmul.f32 256.0, %v1334
  %v1336 = vsub.f32 1.0, %v1335
  %v1337 = vmul.f32 %v1334, %v1336
  %v1338 = vadd.f32 %v1334, %v1337
  %vm1339 = vweird.f32 %v1334
  %v1340 = vsel %vm1339, %v1334, %v1338
  %v1341 = vmul.f32 %v1333, %v1340
  %v1342 = vmul.f32 %v1233, %v1233
  %v1343 = vmul.f32 %v1234, %v1234
  %v1344 = vmul.f32 %v1235, %v1235
  %v1345 = vmul.f32 %v1236, %v1236
  %v1346 = vmul.f32 %v1237, %v1237
  %v1347 = vmul.f32 %v1238, %v1238
  %v1348 = vmul.f32 %v1239, %v1239
  %v1349 = vmul.f32 %v1240, %v1240
  %v1350 = vmul.f32 %v1241, %v1241
  %v1351 = vmul.f32 %v1242, %v1242
  %v1352 = vmul.f32 %v1243, %v1243
  %v1353 = vmul.f32 %v1244, %v1244
  %v1354 = vmul.f32 %v1245, %v1245
  %v1355 = vmul.f32 %v1246, %v1246
  %v1356 = vmul.f32 %v1247, %v1247
  %v1357 = vmul.f32 %v1248, %v1248
  %v1358 = vmul.f32 %v1249, %v1249
  %v1359 = vmul.f32 %v1250, %v1250
  %v1360 = vmul.f32 %v1251, %v1251
  %v1361 = vmul.f32 %v1252, %v1252
  %v1362 = vmul.f32 %v1253, %v1253
  %v1363 = vmul.f32 %v1254, %v1254
  %v1364 = vmul.f32 %v1255, %v1255
  %v1365 = vmul.f32 %v1256, %v1256
  %v1366 = vmul.f32 %v1257, %v1257
  %v1367 = vmul.f32 %v1258, %v1258
  %v1368 = vmul.f32 %v1259, %v1259
  %v1369 = vmul.f32 %v1260, %v1260
  %v1370 = vmul.f32 %v1261, %v1261
  %v1371 = vmul.f32 %v1262, %v1262
  %v1372 = vmul.f32 %v1263, %v1263
  %v1373 = vmul.f32 %v1264, %v1264
  %v1374 = vsel %vm272, %v1342, 0.0
  %v1375 = vsel %vm272, %v1343, 0.0
  %v1376 = vadd.f32 %v1374, %v1375
  %v1377 = vsel %vm272, %v1344, 0.0
  %v1378 = vadd.f32 %v1376, %v1377
  %v1379 = vsel %vm272, %v1345, 0.0
  %v1380 = vadd.f32 %v1378, %v1379
  %v1381 = vsel %vm272, %v1346, 0.0
  %v1382 = vadd.f32 %v1380, %v1381
  %v1383 = vsel %vm272, %v1347, 0.0
  %v1384 = vadd.f32 %v1382, %v1383
  %v1385 = vsel %vm272, %v1348, 0.0
  %v1386 = vadd.f32 %v1384, %v1385
  %v1387 = vsel %vm272, %v1349, 0.0
  %v1388 = vadd.f32 %v1386, %v1387
  %v1389 = vsel %vm272, %v1350, 0.0
  %v1390 = vadd.f32 %v1388, %v1389
  %v1391 = vsel %vm272, %v1351, 0.0
  %v1392 = vadd.f32 %v1390, %v1391
  %v1393 = vsel %vm272, %v1352, 0.0
  %v1394 = vadd.f32 %v1392, %v1393
  %v1395 = vsel %vm272, %v1353, 0.0
  %v1396 = vadd.f32 %v1394, %v1395
  %v1397 = vsel %vm272, %v1354, 0.0
  %v1398 = vadd.f32 %v1396, %v1397
  %v1399 = vsel %vm272, %v1355, 0.0
  %v1400 = vadd.f32 %v1398, %v1399
  %v1401 = vsel %vm272, %v1356, 0.0
  %v1402 = vadd.f32 %v1400, %v1401
  %v1403 = vsel %vm272, %v1357, 0.0
  %v1404 = vadd.f32 %v1402, %v1403
  %v1405 = vsel %vm272, %v1358, 0.0
  %v1406 = vadd.f32 %v1404, %v1405
  %v1407 = vsel %vm272, %v1359, 0.0
  %v1408 = vadd.f32 %v1406, %v1407
  %v1409 = vsel %vm272, %v1360, 0.0
  %v1410 = vadd.f32 %v1408, %v1409
  %v1411 = vsel %vm272, %v1361, 0.0
  %v1412 = vadd.f32 %v1410, %v1411
  %v1413 = vsel %vm272, %v1362, 0.0
  %v1414 = vadd.f32 %v1412, %v1413
  %v1415 = vsel %vm272, %v1363, 0.0
  %v1416 = vadd.f32 %v1414, %v1415
  %v1417 = vsel %vm272, %v1364, 0.0
  %v1418 = vadd.f32 %v1416, %v1417
  %v1419 = vsel %vm272, %v1365, 0.0
  %v1420 = vadd.f32 %v1418, %v1419
  %v1421 = vsel %vm272, %v1366, 0.0
  %v1422 = vadd.f32 %v1420, %v1421
  %v1423 = vsel %vm272, %v1367, 0.0
  %v1424 = vadd.f32 %v1422, %v1423
  %v1425 = vsel %vm272, %v1368, 0.0
  %v1426 = vadd.f32 %v1424, %v1425
  %v1427 = vsel %vm272, %v1369, 0.0
  %v1428 = vadd.f32 %v1426, %v1427
  %v1429 = vsel %vm272, %v1370, 0.0
  %v1430 = vadd.f32 %v1428, %v1429
  %v1431 = vsel %vm272, %v1371, 0.0
  %v1432 = vadd.f32 %v1430, %v1431
  %v1433 = vsel %vm272, %v1372, 0.0
  %v1434 = vadd.f32 %v1432, %v1433
  %v1435 = vsel %vm272, %v1373, 0.0
  %v1436 = vadd.f32 %v1434, %v1435
  %v1437 = vrot.slane %v1436, 4
  %v1438 = vadd.f32 %v1436, %v1437
  %v1439 = vrot.slane %v1438, 2
  %v1440 = vadd.f32 %v1438, %v1439
  %v1441 = vrot.slane %v1440, 1
  %v1442 = vadd.f32 %v1440, %v1441
  %v1443 = vmul.f32 %v1442, %v1340
  %v1444 = vmul.f32 %v1341, %v1341
  %v1445 = vsub.f32 %v1443, %v1444
  %v1446 = vmax.f32 %v1445, 0.0
  %v1447 = vadd.f32 %v1446, 1e-05
  %v1448 = vrsqrt.pop %v1447
  %v1449 = vmul.f32 %v1448, %v1447
  %v1450 = vmul.f32 %v1449, %v1448
  %v1451 = vmul.f32 0.5, %v1450
  %v1452 = vsub.f32 1.5, %v1451
  %v1453 = vmul.f32 %v1448, %v1452
  %vm1454 = vweird.f32 %v1447
  %vm1455 = vweird.f32 %v1448
  %vm1456 = vmor %vm1454, %vm1455
  %v1457 = vsel %vm1456, %v1448, %v1453
  %v1458 = vmul.f32 %v551, %v1457
  %v1459 = vmul.f32 %v1341, %v1458
  %v1460 = vsub.f32 %v552, %v1459
  %v1461 = vperm.slane %v1458, 0
  %v1462 = vmul.f32 %v1233, %v1461
  %v1463 = vmul.f32 %v1234, %v1461
  %v1464 = vmul.f32 %v1235, %v1461
  %v1465 = vmul.f32 %v1236, %v1461
  %v1466 = vmul.f32 %v1237, %v1461
  %v1467 = vmul.f32 %v1238, %v1461
  %v1468 = vmul.f32 %v1239, %v1461
  %v1469 = vmul.f32 %v1240, %v1461
  %v1470 = vmul.f32 %v1241, %v1461
  %v1471 = vmul.f32 %v1242, %v1461
  %v1472 = vmul.f32 %v1243, %v1461
  %v1473 = vmul.f32 %v1244, %v1461
  %v1474 = vmul.f32 %v1245, %v1461
  %v1475 = vmul.f32 %v1246, %v1461
  %v1476 = vmul.f32 %v1247, %v1461
  %v1477 = vmul.f32 %v1248, %v1461
  %v1478 = vmul.f32 %v1249, %v1461
  %v1479 = vmul.f32 %v1250, %v1461
  %v1480 = vmul.f32 %v1251, %v1461
  %v1481 = vmul.f32 %v1252, %v1461
  %v1482 = vmul.f32 %v1253, %v1461
  %v1483 = vmul.f32 %v1254, %v1461
  %v1484 = vmul.f32 %v1255, %v1461
  %v1485 = vmul.f32 %v1256, %v1461
  %v1486 = vmul.f32 %v1257, %v1461
  %v1487 = vmul.f32 %v1258, %v1461
  %v1488 = vmul.f32 %v1259, %v1461
  %v1489 = vmul.f32 %v1260, %v1461
  %v1490 = vmul.f32 %v1261, %v1461
  %v1491 = vmul.f32 %v1262, %v1461
  %v1492 = vmul.f32 %v1263, %v1461
  %v1493 = vmul.f32 %v1264, %v1461
  %v1494 = vperm.slane %v1460, 0
  %v1495 = vadd.f32 %v1462, %v1494
  %v1496 = vadd.f32 %v1463, %v1494
  %v1497 = vadd.f32 %v1464, %v1494
  %v1498 = vadd.f32 %v1465, %v1494
  %v1499 = vadd.f32 %v1466, %v1494
  %v1500 = vadd.f32 %v1467, %v1494
  %v1501 = vadd.f32 %v1468, %v1494
  %v1502 = vadd.f32 %v1469, %v1494
  %v1503 = vadd.f32 %v1470, %v1494
  %v1504 = vadd.f32 %v1471, %v1494
  %v1505 = vadd.f32 %v1472, %v1494
  %v1506 = vadd.f32 %v1473, %v1494
  %v1507 = vadd.f32 %v1474, %v1494
  %v1508 = vadd.f32 %v1475, %v1494
  %v1509 = vadd.f32 %v1476, %v1494
  %v1510 = vadd.f32 %v1477, %v1494
  %v1511 = vadd.f32 %v1478, %v1494
  %v1512 = vadd.f32 %v1479, %v1494
  %v1513 = vadd.f32 %v1480, %v1494
  %v1514 = vadd.f32 %v1481, %v1494
  %v1515 = vadd.f32 %v1482, %v1494
  %v1516 = vadd.f32 %v1483, %v1494
  %v1517 = vadd.f32 %v1484, %v1494
  %v1518 = vadd.f32 %v1485, %v1494
  %v1519 = vadd.f32 %v1486, %v1494
  %v1520 = vadd.f32 %v1487, %v1494
  %v1521 = vadd.f32 %v1488, %v1494
  %v1522 = vadd.f32 %v1489, %v1494
  %v1523 = vadd.f32 %v1490, %v1494
  %v1524 = vadd.f32 %v1491, %v1494
  %v1525 = vadd.f32 %v1492, %v1494
  %v1526 = vadd.f32 %v1493, %v1494
  %v1527 = vtanh.pop %v1495
  %v1528 = vtanh.pop %v1496
  %v1529 = vtanh.pop %v1497
  %v1530 = vtanh.pop %v1498
  %v1531 = vtanh.pop %v1499
  %v1532 = vtanh.pop %v1500
  %v1533 = vtanh.pop %v1501
  %v1534 = vtanh.pop %v1502
  %v1535 = vtanh.pop %v1503
  %v1536 = vtanh.pop %v1504
  %v1537 = vtanh.pop %v1505
  %v1538 = vtanh.pop %v1506
  %v1539 = vtanh.pop %v1507
  %v1540 = vtanh.pop %v1508
  %v1541 = vtanh.pop %v1509
  %v1542 = vtanh.pop %v1510
  %v1543 = vtanh.pop %v1511
  %v1544 = vtanh.pop %v1512
  %v1545 = vtanh.pop %v1513
  %v1546 = vtanh.pop %v1514
  %v1547 = vtanh.pop %v1515
  %v1548 = vtanh.pop %v1516
  %v1549 = vtanh.pop %v1517
  %v1550 = vtanh.pop %v1518
  %v1551 = vtanh.pop %v1519
  %v1552 = vtanh.pop %v1520
  %v1553 = vtanh.pop %v1521
  %v1554 = vtanh.pop %v1522
  %v1555 = vtanh.pop %v1523
  %v1556 = vtanh.pop %v1524
  %v1557 = vtanh.pop %v1525
  %v1558 = vtanh.pop %v1526
  %v1559 = vld [vmem:[%s6] sm:$0xf]
  %v1560 = vld [vmem:[%s6 + $0x4] sm:$0xf]
  %v1561 = vld [vmem:[%s6 + $0x8] sm:$0xf]
  %v1562 = vld [vmem:[%s6 + $0xc] sm:$0xf]
  %v1563 = vld [vmem:[%s7 + $0x3] sm:$0x1]
  %v1564 = vld [vmem:[%s7 + $0x4] sm:$0x1]
  %v1565 = vld [vmem:[%s7 + $0x5] sm:$0x1]
  %v1566 = vpack.c.bf16 %v1528, %v1527
  %v1567 = vpack.c.bf16 %v1530, %v1529
  %v1568 = vpack.c.bf16 %v1532, %v1531
  %v1569 = vpack.c.bf16 %v1534, %v1533
  %v1570 = vpack.c.bf16 %v1536, %v1535
  %v1571 = vpack.c.bf16 %v1538, %v1537
  %v1572 = vpack.c.bf16 %v1540, %v1539
  %v1573 = vpack.c.bf16 %v1542, %v1541
  %v1574 = vpack.c.bf16 %v1544, %v1543
  %v1575 = vpack.c.bf16 %v1546, %v1545
  %v1576 = vpack.c.bf16 %v1548, %v1547
  %v1577 = vpack.c.bf16 %v1550, %v1549
  %v1578 = vpack.c.bf16 %v1552, %v1551
  %v1579 = vpack.c.bf16 %v1554, %v1553
  %v1580 = vpack.c.bf16 %v1556, %v1555
  %v1581 = vpack.c.bf16 %v1558, %v1557
  %1582 = vmatpush.bf16.msra.mxu0 %v1573
  %1583 = vmatpush.bf16.msra.mxu0 %v1572
  %1584 = vmatpush.bf16.msra.mxu0 %v1571
  %1585 = vmatpush.bf16.msra.mxu0 %v1570
  %1586 = vmatpush.bf16.msra.mxu0 %v1569
  %1587 = vmatpush.bf16.msra.mxu0 %v1568
  %1588 = vmatpush.bf16.msra.mxu0 %v1567
  %1589 = vmatpush.bf16.msra.mxu0 %v1566
  %1590 = vmatmul.bf16.gmra.mxu0 %v665
  %v1591 = vpop.f32.mrf.mxu0
  %v1592 = vadd.f32 0.0, %v1591
  %v1593 = vpop.f32.mrf.mxu0
  %v1594 = vadd.f32 0.0, %v1593
  %1595 = vmatmul.bf16.gmra.mxu0 %v667
  %v1596 = vpop.f32.mrf.mxu0
  %v1597 = vadd.f32 0.0, %v1596
  %v1598 = vpop.f32.mrf.mxu0
  %v1599 = vadd.f32 0.0, %v1598
  %1600 = vmatmul.bf16.gmra.mxu0 %v669
  %v1601 = vpop.f32.mrf.mxu0
  %v1602 = vadd.f32 0.0, %v1601
  %v1603 = vpop.f32.mrf.mxu0
  %v1604 = vadd.f32 0.0, %v1603
  %1605 = vmatmul.bf16.gmra.mxu0 %v671
  %v1606 = vpop.f32.mrf.mxu0
  %v1607 = vadd.f32 0.0, %v1606
  %v1608 = vpop.f32.mrf.mxu0
  %v1609 = vadd.f32 0.0, %v1608
  %1610 = vmatmul.bf16.gmra.mxu0 %v673
  %v1611 = vpop.f32.mrf.mxu0
  %v1612 = vadd.f32 0.0, %v1611
  %v1613 = vpop.f32.mrf.mxu0
  %v1614 = vadd.f32 0.0, %v1613
  %1615 = vmatmul.bf16.gmra.mxu0 %v675
  %v1616 = vpop.f32.mrf.mxu0
  %v1617 = vadd.f32 0.0, %v1616
  %v1618 = vpop.f32.mrf.mxu0
  %v1619 = vadd.f32 0.0, %v1618
  %1620 = vmatmul.bf16.gmra.mxu0 %v677
  %v1621 = vpop.f32.mrf.mxu0
  %v1622 = vadd.f32 0.0, %v1621
  %v1623 = vpop.f32.mrf.mxu0
  %v1624 = vadd.f32 0.0, %v1623
  %1625 = vmatmul.bf16.gmra.mxu0 %v679
  %v1626 = vpop.f32.mrf.mxu0
  %v1627 = vadd.f32 0.0, %v1626
  %v1628 = vpop.f32.mrf.mxu0
  %v1629 = vadd.f32 0.0, %v1628
  %1630 = vmatmul.bf16.gmra.mxu0 %v681
  %v1631 = vpop.f32.mrf.mxu0
  %v1632 = vadd.f32 0.0, %v1631
  %v1633 = vpop.f32.mrf.mxu0
  %v1634 = vadd.f32 0.0, %v1633
  %1635 = vmatmul.bf16.gmra.mxu0 %v683
  %v1636 = vpop.f32.mrf.mxu0
  %v1637 = vadd.f32 0.0, %v1636
  %v1638 = vpop.f32.mrf.mxu0
  %v1639 = vadd.f32 0.0, %v1638
  %1640 = vmatmul.bf16.gmra.mxu0 %v685
  %v1641 = vpop.f32.mrf.mxu0
  %v1642 = vadd.f32 0.0, %v1641
  %v1643 = vpop.f32.mrf.mxu0
  %v1644 = vadd.f32 0.0, %v1643
  %1645 = vmatmul.bf16.gmra.mxu0 %v687
  %v1646 = vpop.f32.mrf.mxu0
  %v1647 = vadd.f32 0.0, %v1646
  %v1648 = vpop.f32.mrf.mxu0
  %v1649 = vadd.f32 0.0, %v1648
  %1650 = vmatmul.bf16.gmra.mxu0 %v689
  %v1651 = vpop.f32.mrf.mxu0
  %v1652 = vadd.f32 0.0, %v1651
  %v1653 = vpop.f32.mrf.mxu0
  %v1654 = vadd.f32 0.0, %v1653
  %1655 = vmatmul.bf16.gmra.mxu0 %v691
  %v1656 = vpop.f32.mrf.mxu0
  %v1657 = vadd.f32 0.0, %v1656
  %v1658 = vpop.f32.mrf.mxu0
  %v1659 = vadd.f32 0.0, %v1658
  %1660 = vmatmul.bf16.gmra.mxu0 %v693
  %v1661 = vpop.f32.mrf.mxu0
  %v1662 = vadd.f32 0.0, %v1661
  %v1663 = vpop.f32.mrf.mxu0
  %v1664 = vadd.f32 0.0, %v1663
  %1665 = vmatmul.bf16.gmra.mxu0 %v695
  %v1666 = vpop.f32.mrf.mxu0
  %v1667 = vadd.f32 0.0, %v1666
  %v1668 = vpop.f32.mrf.mxu0
  %v1669 = vadd.f32 0.0, %v1668
  %1670 = vdwg.mxu0
  %1671 = vmatpush.bf16.msra.mxu0 %v1581
  %1672 = vmatpush.bf16.msra.mxu0 %v1580
  %1673 = vmatpush.bf16.msra.mxu0 %v1579
  %1674 = vmatpush.bf16.msra.mxu0 %v1578
  %1675 = vmatpush.bf16.msra.mxu0 %v1577
  %1676 = vmatpush.bf16.msra.mxu0 %v1576
  %1677 = vmatpush.bf16.msra.mxu0 %v1575
  %1678 = vmatpush.bf16.msra.mxu0 %v1574
  %1679 = vmatmul.bf16.gmra.mxu0 %v666
  %v1680 = vpop.f32.mrf.mxu0
  %v1681 = vadd.f32 %v1592, %v1680
  %v1682 = vpop.f32.mrf.mxu0
  %v1683 = vadd.f32 %v1594, %v1682
  %1684 = vmatmul.bf16.gmra.mxu0 %v668
  %v1685 = vpop.f32.mrf.mxu0
  %v1686 = vadd.f32 %v1597, %v1685
  %v1687 = vpop.f32.mrf.mxu0
  %v1688 = vadd.f32 %v1599, %v1687
  %1689 = vmatmul.bf16.gmra.mxu0 %v670
  %v1690 = vpop.f32.mrf.mxu0
  %v1691 = vadd.f32 %v1602, %v1690
  %v1692 = vpop.f32.mrf.mxu0
  %v1693 = vadd.f32 %v1604, %v1692
  %1694 = vmatmul.bf16.gmra.mxu0 %v672
  %v1695 = vpop.f32.mrf.mxu0
  %v1696 = vadd.f32 %v1607, %v1695
  %v1697 = vpop.f32.mrf.mxu0
  %v1698 = vadd.f32 %v1609, %v1697
  %1699 = vmatmul.bf16.gmra.mxu0 %v674
  %v1700 = vpop.f32.mrf.mxu0
  %v1701 = vadd.f32 %v1612, %v1700
  %v1702 = vpop.f32.mrf.mxu0
  %v1703 = vadd.f32 %v1614, %v1702
  %1704 = vmatmul.bf16.gmra.mxu0 %v676
  %v1705 = vpop.f32.mrf.mxu0
  %v1706 = vadd.f32 %v1617, %v1705
  %v1707 = vpop.f32.mrf.mxu0
  %v1708 = vadd.f32 %v1619, %v1707
  %1709 = vmatmul.bf16.gmra.mxu0 %v678
  %v1710 = vpop.f32.mrf.mxu0
  %v1711 = vadd.f32 %v1622, %v1710
  %v1712 = vpop.f32.mrf.mxu0
  %v1713 = vadd.f32 %v1624, %v1712
  %1714 = vmatmul.bf16.gmra.mxu0 %v680
  %v1715 = vpop.f32.mrf.mxu0
  %v1716 = vadd.f32 %v1627, %v1715
  %v1717 = vpop.f32.mrf.mxu0
  %v1718 = vadd.f32 %v1629, %v1717
  %1719 = vmatmul.bf16.gmra.mxu0 %v682
  %v1720 = vpop.f32.mrf.mxu0
  %v1721 = vadd.f32 %v1632, %v1720
  %v1722 = vpop.f32.mrf.mxu0
  %v1723 = vadd.f32 %v1634, %v1722
  %1724 = vmatmul.bf16.gmra.mxu0 %v684
  %v1725 = vpop.f32.mrf.mxu0
  %v1726 = vadd.f32 %v1637, %v1725
  %v1727 = vpop.f32.mrf.mxu0
  %v1728 = vadd.f32 %v1639, %v1727
  %1729 = vmatmul.bf16.gmra.mxu0 %v686
  %v1730 = vpop.f32.mrf.mxu0
  %v1731 = vadd.f32 %v1642, %v1730
  %v1732 = vpop.f32.mrf.mxu0
  %v1733 = vadd.f32 %v1644, %v1732
  %1734 = vmatmul.bf16.gmra.mxu0 %v688
  %v1735 = vpop.f32.mrf.mxu0
  %v1736 = vadd.f32 %v1647, %v1735
  %v1737 = vpop.f32.mrf.mxu0
  %v1738 = vadd.f32 %v1649, %v1737
  %1739 = vmatmul.bf16.gmra.mxu0 %v690
  %v1740 = vpop.f32.mrf.mxu0
  %v1741 = vadd.f32 %v1652, %v1740
  %v1742 = vpop.f32.mrf.mxu0
  %v1743 = vadd.f32 %v1654, %v1742
  %1744 = vmatmul.bf16.gmra.mxu0 %v692
  %v1745 = vpop.f32.mrf.mxu0
  %v1746 = vadd.f32 %v1657, %v1745
  %v1747 = vpop.f32.mrf.mxu0
  %v1748 = vadd.f32 %v1659, %v1747
  %1749 = vmatmul.bf16.gmra.mxu0 %v694
  %v1750 = vpop.f32.mrf.mxu0
  %v1751 = vadd.f32 %v1662, %v1750
  %v1752 = vpop.f32.mrf.mxu0
  %v1753 = vadd.f32 %v1664, %v1752
  %1754 = vmatmul.bf16.gmra.mxu0 %v696
  %v1755 = vpop.f32.mrf.mxu0
  %v1756 = vadd.f32 %v1667, %v1755
  %v1757 = vpop.f32.mrf.mxu0
  %v1758 = vadd.f32 %v1669, %v1757
  %1759 = vdwg.mxu0
  %v1760 = vpack.c.bf16 %v1683, %v1681
  %v1761 = vpack.c.bf16 %v1688, %v1686
  %v1762 = vpack.c.bf16 %v1693, %v1691
  %v1763 = vpack.c.bf16 %v1698, %v1696
  %v1764 = vpack.c.bf16 %v1703, %v1701
  %v1765 = vpack.c.bf16 %v1708, %v1706
  %v1766 = vpack.c.bf16 %v1713, %v1711
  %v1767 = vpack.c.bf16 %v1718, %v1716
  %v1768 = vpack.c.bf16 %v1723, %v1721
  %v1769 = vpack.c.bf16 %v1728, %v1726
  %v1770 = vpack.c.bf16 %v1733, %v1731
  %v1771 = vpack.c.bf16 %v1738, %v1736
  %v1772 = vpack.c.bf16 %v1743, %v1741
  %v1773 = vpack.c.bf16 %v1748, %v1746
  %v1774 = vpack.c.bf16 %v1753, %v1751
  %v1775 = vpack.c.bf16 %v1758, %v1756
  %v1776 = vperm.slane %v1563, 0
  %v1781 = vunpack.c.l.b16 %v1559
  %v1782 = vunpack.c.l.b16 %v1560
  %v1783 = vunpack.c.l.b16 %v1561
  %v1784 = vunpack.c.l.b16 %v1562
  %v1785 = vpack.c.b16 %v1782, %v1781
  %v1786 = vpack.c.b16 %v1784, %v1783
  %v1790 = vsel %vm272, %v1760, 0
  %v1793 = vsel %vm272, %v1761, 0
  %v1796 = vsel %vm272, %v1762, 0
  %v1799 = vsel %vm272, %v1763, 0
  %v1802 = vsel %vm272, %v1764, 0
  %v1805 = vsel %vm272, %v1765, 0
  %v1808 = vsel %vm272, %v1766, 0
  %v1811 = vsel %vm272, %v1767, 0
  %v1814 = vsel %vm272, %v1768, 0
  %v1817 = vsel %vm272, %v1769, 0
  %v1820 = vsel %vm272, %v1770, 0
  %v1823 = vsel %vm272, %v1771, 0
  %v1826 = vsel %vm272, %v1772, 0
  %v1829 = vsel %vm272, %v1773, 0
  %v1832 = vsel %vm272, %v1774, 0
  %v1835 = vsel %vm272, %v1775, 0
  %1837 = vmatpush.bf16.msra.mxu0 0
  %1838 = vmatpush.bf16.msra.mxu0 0
  %1839 = vmatpush.bf16.msra.mxu0 0
  %1840 = vmatpush.bf16.msra.mxu0 0
  %1841 = vmatpush.bf16.msra.mxu0 0
  %1842 = vmatpush.bf16.msra.mxu0 0
  %1843 = vmatpush.bf16.msra.mxu0 %v1786
  %1844 = vmatpush.bf16.msra.mxu0 %v1785
  %1845 = vmatmul.bf16.gmra.mxu0 %v1790
  %v1846 = vpop.f32.mrf.mxu0
  %v1847 = vadd.f32 %v1776, %v1846
  %v1848 = vpop.f32.mrf.mxu0
  %v1849 = vadd.f32 %v1776, %v1848
  %1850 = vmatmul.bf16.gmra.mxu0 %v1793
  %v1851 = vpop.f32.mrf.mxu0
  %v1852 = vadd.f32 %v1776, %v1851
  %v1853 = vpop.f32.mrf.mxu0
  %v1854 = vadd.f32 %v1776, %v1853
  %1855 = vmatmul.bf16.gmra.mxu0 %v1796
  %v1856 = vpop.f32.mrf.mxu0
  %v1857 = vadd.f32 %v1776, %v1856
  %v1858 = vpop.f32.mrf.mxu0
  %v1859 = vadd.f32 %v1776, %v1858
  %1860 = vmatmul.bf16.gmra.mxu0 %v1799
  %v1861 = vpop.f32.mrf.mxu0
  %v1862 = vadd.f32 %v1776, %v1861
  %v1863 = vpop.f32.mrf.mxu0
  %v1864 = vadd.f32 %v1776, %v1863
  %1865 = vmatmul.bf16.gmra.mxu0 %v1802
  %v1866 = vpop.f32.mrf.mxu0
  %v1867 = vadd.f32 %v1776, %v1866
  %v1868 = vpop.f32.mrf.mxu0
  %v1869 = vadd.f32 %v1776, %v1868
  %1870 = vmatmul.bf16.gmra.mxu0 %v1805
  %v1871 = vpop.f32.mrf.mxu0
  %v1872 = vadd.f32 %v1776, %v1871
  %v1873 = vpop.f32.mrf.mxu0
  %v1874 = vadd.f32 %v1776, %v1873
  %1875 = vmatmul.bf16.gmra.mxu0 %v1808
  %v1876 = vpop.f32.mrf.mxu0
  %v1877 = vadd.f32 %v1776, %v1876
  %v1878 = vpop.f32.mrf.mxu0
  %v1879 = vadd.f32 %v1776, %v1878
  %1880 = vmatmul.bf16.gmra.mxu0 %v1811
  %v1881 = vpop.f32.mrf.mxu0
  %v1882 = vadd.f32 %v1776, %v1881
  %v1883 = vpop.f32.mrf.mxu0
  %v1884 = vadd.f32 %v1776, %v1883
  %1885 = vmatmul.bf16.gmra.mxu0 %v1814
  %v1886 = vpop.f32.mrf.mxu0
  %v1887 = vadd.f32 %v1776, %v1886
  %v1888 = vpop.f32.mrf.mxu0
  %v1889 = vadd.f32 %v1776, %v1888
  %1890 = vmatmul.bf16.gmra.mxu0 %v1817
  %v1891 = vpop.f32.mrf.mxu0
  %v1892 = vadd.f32 %v1776, %v1891
  %v1893 = vpop.f32.mrf.mxu0
  %v1894 = vadd.f32 %v1776, %v1893
  %1895 = vmatmul.bf16.gmra.mxu0 %v1820
  %v1896 = vpop.f32.mrf.mxu0
  %v1897 = vadd.f32 %v1776, %v1896
  %v1898 = vpop.f32.mrf.mxu0
  %v1899 = vadd.f32 %v1776, %v1898
  %1900 = vmatmul.bf16.gmra.mxu0 %v1823
  %v1901 = vpop.f32.mrf.mxu0
  %v1902 = vadd.f32 %v1776, %v1901
  %v1903 = vpop.f32.mrf.mxu0
  %v1904 = vadd.f32 %v1776, %v1903
  %1905 = vmatmul.bf16.gmra.mxu0 %v1826
  %v1906 = vpop.f32.mrf.mxu0
  %v1907 = vadd.f32 %v1776, %v1906
  %v1908 = vpop.f32.mrf.mxu0
  %v1909 = vadd.f32 %v1776, %v1908
  %1910 = vmatmul.bf16.gmra.mxu0 %v1829
  %v1911 = vpop.f32.mrf.mxu0
  %v1912 = vadd.f32 %v1776, %v1911
  %v1913 = vpop.f32.mrf.mxu0
  %v1914 = vadd.f32 %v1776, %v1913
  %1915 = vmatmul.bf16.gmra.mxu0 %v1832
  %v1916 = vpop.f32.mrf.mxu0
  %v1917 = vadd.f32 %v1776, %v1916
  %v1918 = vpop.f32.mrf.mxu0
  %v1919 = vadd.f32 %v1776, %v1918
  %1920 = vmatmul.bf16.gmra.mxu0 %v1835
  %v1921 = vpop.f32.mrf.mxu0
  %v1922 = vadd.f32 %v1776, %v1921
  %v1923 = vpop.f32.mrf.mxu0
  %v1924 = vadd.f32 %v1776, %v1923
  %1925 = vdwg.mxu0
  %v1926 = vmul.f32 %v1847, %v1076
  %v1927 = vmul.f32 %v1849, %v1081
  %v1928 = vmul.f32 %v1852, %v1086
  %v1929 = vmul.f32 %v1854, %v1091
  %v1930 = vmul.f32 %v1857, %v1096
  %v1931 = vmul.f32 %v1859, %v1101
  %v1932 = vmul.f32 %v1862, %v1106
  %v1933 = vmul.f32 %v1864, %v1111
  %v1934 = vmul.f32 %v1867, %v1116
  %v1935 = vmul.f32 %v1869, %v1121
  %v1936 = vmul.f32 %v1872, %v1126
  %v1937 = vmul.f32 %v1874, %v1131
  %v1938 = vmul.f32 %v1877, %v1136
  %v1939 = vmul.f32 %v1879, %v1141
  %v1940 = vmul.f32 %v1882, %v1146
  %v1941 = vmul.f32 %v1884, %v1151
  %v1942 = vmul.f32 %v1887, %v1156
  %v1943 = vmul.f32 %v1889, %v1161
  %v1944 = vmul.f32 %v1892, %v1166
  %v1945 = vmul.f32 %v1894, %v1171
  %v1946 = vmul.f32 %v1897, %v1176
  %v1947 = vmul.f32 %v1899, %v1181
  %v1948 = vmul.f32 %v1902, %v1186
  %v1949 = vmul.f32 %v1904, %v1191
  %v1950 = vmul.f32 %v1907, %v1196
  %v1951 = vmul.f32 %v1909, %v1201
  %v1952 = vmul.f32 %v1912, %v1206
  %v1953 = vmul.f32 %v1914, %v1211
  %v1954 = vmul.f32 %v1917, %v1216
  %v1955 = vmul.f32 %v1919, %v1221
  %v1956 = vmul.f32 %v1922, %v1226
  %v1957 = vmul.f32 %v1924, %v1231
  %v1958 = vsel %vm272, %v1926, 0.0
  %v1959 = vsel %vm272, %v1927, 0.0
  %v1960 = vadd.f32 %v1958, %v1959
  %v1961 = vsel %vm272, %v1928, 0.0
  %v1962 = vadd.f32 %v1960, %v1961
  %v1963 = vsel %vm272, %v1929, 0.0
  %v1964 = vadd.f32 %v1962, %v1963
  %v1965 = vsel %vm272, %v1930, 0.0
  %v1966 = vadd.f32 %v1964, %v1965
  %v1967 = vsel %vm272, %v1931, 0.0
  %v1968 = vadd.f32 %v1966, %v1967
  %v1969 = vsel %vm272, %v1932, 0.0
  %v1970 = vadd.f32 %v1968, %v1969
  %v1971 = vsel %vm272, %v1933, 0.0
  %v1972 = vadd.f32 %v1970, %v1971
  %v1973 = vsel %vm272, %v1934, 0.0
  %v1974 = vadd.f32 %v1972, %v1973
  %v1975 = vsel %vm272, %v1935, 0.0
  %v1976 = vadd.f32 %v1974, %v1975
  %v1977 = vsel %vm272, %v1936, 0.0
  %v1978 = vadd.f32 %v1976, %v1977
  %v1979 = vsel %vm272, %v1937, 0.0
  %v1980 = vadd.f32 %v1978, %v1979
  %v1981 = vsel %vm272, %v1938, 0.0
  %v1982 = vadd.f32 %v1980, %v1981
  %v1983 = vsel %vm272, %v1939, 0.0
  %v1984 = vadd.f32 %v1982, %v1983
  %v1985 = vsel %vm272, %v1940, 0.0
  %v1986 = vadd.f32 %v1984, %v1985
  %v1987 = vsel %vm272, %v1941, 0.0
  %v1988 = vadd.f32 %v1986, %v1987
  %v1989 = vsel %vm272, %v1942, 0.0
  %v1990 = vadd.f32 %v1988, %v1989
  %v1991 = vsel %vm272, %v1943, 0.0
  %v1992 = vadd.f32 %v1990, %v1991
  %v1993 = vsel %vm272, %v1944, 0.0
  %v1994 = vadd.f32 %v1992, %v1993
  %v1995 = vsel %vm272, %v1945, 0.0
  %v1996 = vadd.f32 %v1994, %v1995
  %v1997 = vsel %vm272, %v1946, 0.0
  %v1998 = vadd.f32 %v1996, %v1997
  %v1999 = vsel %vm272, %v1947, 0.0
  %v2000 = vadd.f32 %v1998, %v1999
  %v2001 = vsel %vm272, %v1948, 0.0
  %v2002 = vadd.f32 %v2000, %v2001
  %v2003 = vsel %vm272, %v1949, 0.0
  %v2004 = vadd.f32 %v2002, %v2003
  %v2005 = vsel %vm272, %v1950, 0.0
  %v2006 = vadd.f32 %v2004, %v2005
  %v2007 = vsel %vm272, %v1951, 0.0
  %v2008 = vadd.f32 %v2006, %v2007
  %v2009 = vsel %vm272, %v1952, 0.0
  %v2010 = vadd.f32 %v2008, %v2009
  %v2011 = vsel %vm272, %v1953, 0.0
  %v2012 = vadd.f32 %v2010, %v2011
  %v2013 = vsel %vm272, %v1954, 0.0
  %v2014 = vadd.f32 %v2012, %v2013
  %v2015 = vsel %vm272, %v1955, 0.0
  %v2016 = vadd.f32 %v2014, %v2015
  %v2017 = vsel %vm272, %v1956, 0.0
  %v2018 = vadd.f32 %v2016, %v2017
  %v2019 = vsel %vm272, %v1957, 0.0
  %v2020 = vadd.f32 %v2018, %v2019
  %v2021 = vrot.slane %v2020, 4
  %v2022 = vadd.f32 %v2020, %v2021
  %v2023 = vrot.slane %v2022, 2
  %v2024 = vadd.f32 %v2022, %v2023
  %v2025 = vrot.slane %v2024, 1
  %v2026 = vadd.f32 %v2024, %v2025
  %v2027 = vmul.f32 %v2026, %v1340
  %v2028 = vmul.f32 %v1926, %v1926
  %v2029 = vmul.f32 %v1927, %v1927
  %v2030 = vmul.f32 %v1928, %v1928
  %v2031 = vmul.f32 %v1929, %v1929
  %v2032 = vmul.f32 %v1930, %v1930
  %v2033 = vmul.f32 %v1931, %v1931
  %v2034 = vmul.f32 %v1932, %v1932
  %v2035 = vmul.f32 %v1933, %v1933
  %v2036 = vmul.f32 %v1934, %v1934
  %v2037 = vmul.f32 %v1935, %v1935
  %v2038 = vmul.f32 %v1936, %v1936
  %v2039 = vmul.f32 %v1937, %v1937
  %v2040 = vmul.f32 %v1938, %v1938
  %v2041 = vmul.f32 %v1939, %v1939
  %v2042 = vmul.f32 %v1940, %v1940
  %v2043 = vmul.f32 %v1941, %v1941
  %v2044 = vmul.f32 %v1942, %v1942
  %v2045 = vmul.f32 %v1943, %v1943
  %v2046 = vmul.f32 %v1944, %v1944
  %v2047 = vmul.f32 %v1945, %v1945
  %v2048 = vmul.f32 %v1946, %v1946
  %v2049 = vmul.f32 %v1947, %v1947
  %v2050 = vmul.f32 %v1948, %v1948
  %v2051 = vmul.f32 %v1949, %v1949
  %v2052 = vmul.f32 %v1950, %v1950
  %v2053 = vmul.f32 %v1951, %v1951
  %v2054 = vmul.f32 %v1952, %v1952
  %v2055 = vmul.f32 %v1953, %v1953
  %v2056 = vmul.f32 %v1954, %v1954
  %v2057 = vmul.f32 %v1955, %v1955
  %v2058 = vmul.f32 %v1956, %v1956
  %v2059 = vmul.f32 %v1957, %v1957
  %v2060 = vsel %vm272, %v2028, 0.0
  %v2061 = vsel %vm272, %v2029, 0.0
  %v2062 = vadd.f32 %v2060, %v2061
  %v2063 = vsel %vm272, %v2030, 0.0
  %v2064 = vadd.f32 %v2062, %v2063
  %v2065 = vsel %vm272, %v2031, 0.0
  %v2066 = vadd.f32 %v2064, %v2065
  %v2067 = vsel %vm272, %v2032, 0.0
  %v2068 = vadd.f32 %v2066, %v2067
  %v2069 = vsel %vm272, %v2033, 0.0
  %v2070 = vadd.f32 %v2068, %v2069
  %v2071 = vsel %vm272, %v2034, 0.0
  %v2072 = vadd.f32 %v2070, %v2071
  %v2073 = vsel %vm272, %v2035, 0.0
  %v2074 = vadd.f32 %v2072, %v2073
  %v2075 = vsel %vm272, %v2036, 0.0
  %v2076 = vadd.f32 %v2074, %v2075
  %v2077 = vsel %vm272, %v2037, 0.0
  %v2078 = vadd.f32 %v2076, %v2077
  %v2079 = vsel %vm272, %v2038, 0.0
  %v2080 = vadd.f32 %v2078, %v2079
  %v2081 = vsel %vm272, %v2039, 0.0
  %v2082 = vadd.f32 %v2080, %v2081
  %v2083 = vsel %vm272, %v2040, 0.0
  %v2084 = vadd.f32 %v2082, %v2083
  %v2085 = vsel %vm272, %v2041, 0.0
  %v2086 = vadd.f32 %v2084, %v2085
  %v2087 = vsel %vm272, %v2042, 0.0
  %v2088 = vadd.f32 %v2086, %v2087
  %v2089 = vsel %vm272, %v2043, 0.0
  %v2090 = vadd.f32 %v2088, %v2089
  %v2091 = vsel %vm272, %v2044, 0.0
  %v2092 = vadd.f32 %v2090, %v2091
  %v2093 = vsel %vm272, %v2045, 0.0
  %v2094 = vadd.f32 %v2092, %v2093
  %v2095 = vsel %vm272, %v2046, 0.0
  %v2096 = vadd.f32 %v2094, %v2095
  %v2097 = vsel %vm272, %v2047, 0.0
  %v2098 = vadd.f32 %v2096, %v2097
  %v2099 = vsel %vm272, %v2048, 0.0
  %v2100 = vadd.f32 %v2098, %v2099
  %v2101 = vsel %vm272, %v2049, 0.0
  %v2102 = vadd.f32 %v2100, %v2101
  %v2103 = vsel %vm272, %v2050, 0.0
  %v2104 = vadd.f32 %v2102, %v2103
  %v2105 = vsel %vm272, %v2051, 0.0
  %v2106 = vadd.f32 %v2104, %v2105
  %v2107 = vsel %vm272, %v2052, 0.0
  %v2108 = vadd.f32 %v2106, %v2107
  %v2109 = vsel %vm272, %v2053, 0.0
  %v2110 = vadd.f32 %v2108, %v2109
  %v2111 = vsel %vm272, %v2054, 0.0
  %v2112 = vadd.f32 %v2110, %v2111
  %v2113 = vsel %vm272, %v2055, 0.0
  %v2114 = vadd.f32 %v2112, %v2113
  %v2115 = vsel %vm272, %v2056, 0.0
  %v2116 = vadd.f32 %v2114, %v2115
  %v2117 = vsel %vm272, %v2057, 0.0
  %v2118 = vadd.f32 %v2116, %v2117
  %v2119 = vsel %vm272, %v2058, 0.0
  %v2120 = vadd.f32 %v2118, %v2119
  %v2121 = vsel %vm272, %v2059, 0.0
  %v2122 = vadd.f32 %v2120, %v2121
  %v2123 = vrot.slane %v2122, 4
  %v2124 = vadd.f32 %v2122, %v2123
  %v2125 = vrot.slane %v2124, 2
  %v2126 = vadd.f32 %v2124, %v2125
  %v2127 = vrot.slane %v2126, 1
  %v2128 = vadd.f32 %v2126, %v2127
  %v2129 = vmul.f32 %v2128, %v1340
  %v2130 = vmul.f32 %v2027, %v2027
  %v2131 = vsub.f32 %v2129, %v2130
  %v2132 = vmax.f32 %v2131, 0.0
  %v2133 = vadd.f32 %v2132, 1e-05
  %v2134 = vrsqrt.pop %v2133
  %v2135 = vmul.f32 %v2134, %v2133
  %v2136 = vmul.f32 %v2135, %v2134
  %v2137 = vmul.f32 0.5, %v2136
  %v2138 = vsub.f32 1.5, %v2137
  %v2139 = vmul.f32 %v2134, %v2138
  %vm2140 = vweird.f32 %v2133
  %vm2141 = vweird.f32 %v2134
  %vm2142 = vmor %vm2140, %vm2141
  %v2143 = vsel %vm2142, %v2134, %v2139
  %v2144 = vmul.f32 %v1564, %v2143
  %v2145 = vmul.f32 %v2027, %v2144
  %v2146 = vsub.f32 %v1565, %v2145
  %v2147 = vperm.slane %v2144, 0
  %v2148 = vmul.f32 %v1926, %v2147
  %v2149 = vmul.f32 %v1927, %v2147
  %v2150 = vmul.f32 %v1928, %v2147
  %v2151 = vmul.f32 %v1929, %v2147
  %v2152 = vmul.f32 %v1930, %v2147
  %v2153 = vmul.f32 %v1931, %v2147
  %v2154 = vmul.f32 %v1932, %v2147
  %v2155 = vmul.f32 %v1933, %v2147
  %v2156 = vmul.f32 %v1934, %v2147
  %v2157 = vmul.f32 %v1935, %v2147
  %v2158 = vmul.f32 %v1936, %v2147
  %v2159 = vmul.f32 %v1937, %v2147
  %v2160 = vmul.f32 %v1938, %v2147
  %v2161 = vmul.f32 %v1939, %v2147
  %v2162 = vmul.f32 %v1940, %v2147
  %v2163 = vmul.f32 %v1941, %v2147
  %v2164 = vmul.f32 %v1942, %v2147
  %v2165 = vmul.f32 %v1943, %v2147
  %v2166 = vmul.f32 %v1944, %v2147
  %v2167 = vmul.f32 %v1945, %v2147
  %v2168 = vmul.f32 %v1946, %v2147
  %v2169 = vmul.f32 %v1947, %v2147
  %v2170 = vmul.f32 %v1948, %v2147
  %v2171 = vmul.f32 %v1949, %v2147
  %v2172 = vmul.f32 %v1950, %v2147
  %v2173 = vmul.f32 %v1951, %v2147
  %v2174 = vmul.f32 %v1952, %v2147
  %v2175 = vmul.f32 %v1953, %v2147
  %v2176 = vmul.f32 %v1954, %v2147
  %v2177 = vmul.f32 %v1955, %v2147
  %v2178 = vmul.f32 %v1956, %v2147
  %v2179 = vmul.f32 %v1957, %v2147
  %v2180 = vperm.slane %v2146, 0
  %v2181 = vadd.f32 %v2148, %v2180
  %v2182 = vadd.f32 %v2149, %v2180
  %v2183 = vadd.f32 %v2150, %v2180
  %v2184 = vadd.f32 %v2151, %v2180
  %v2185 = vadd.f32 %v2152, %v2180
  %v2186 = vadd.f32 %v2153, %v2180
  %v2187 = vadd.f32 %v2154, %v2180
  %v2188 = vadd.f32 %v2155, %v2180
  %v2189 = vadd.f32 %v2156, %v2180
  %v2190 = vadd.f32 %v2157, %v2180
  %v2191 = vadd.f32 %v2158, %v2180
  %v2192 = vadd.f32 %v2159, %v2180
  %v2193 = vadd.f32 %v2160, %v2180
  %v2194 = vadd.f32 %v2161, %v2180
  %v2195 = vadd.f32 %v2162, %v2180
  %v2196 = vadd.f32 %v2163, %v2180
  %v2197 = vadd.f32 %v2164, %v2180
  %v2198 = vadd.f32 %v2165, %v2180
  %v2199 = vadd.f32 %v2166, %v2180
  %v2200 = vadd.f32 %v2167, %v2180
  %v2201 = vadd.f32 %v2168, %v2180
  %v2202 = vadd.f32 %v2169, %v2180
  %v2203 = vadd.f32 %v2170, %v2180
  %v2204 = vadd.f32 %v2171, %v2180
  %v2205 = vadd.f32 %v2172, %v2180
  %v2206 = vadd.f32 %v2173, %v2180
  %v2207 = vadd.f32 %v2174, %v2180
  %v2208 = vadd.f32 %v2175, %v2180
  %v2209 = vadd.f32 %v2176, %v2180
  %v2210 = vadd.f32 %v2177, %v2180
  %v2211 = vadd.f32 %v2178, %v2180
  %v2212 = vadd.f32 %v2179, %v2180
  %v2213 = vtanh.pop %v2181
  %v2214 = vtanh.pop %v2182
  %v2215 = vtanh.pop %v2183
  %v2216 = vtanh.pop %v2184
  %v2217 = vtanh.pop %v2185
  %v2218 = vtanh.pop %v2186
  %v2219 = vtanh.pop %v2187
  %v2220 = vtanh.pop %v2188
  %v2221 = vtanh.pop %v2189
  %v2222 = vtanh.pop %v2190
  %v2223 = vtanh.pop %v2191
  %v2224 = vtanh.pop %v2192
  %v2225 = vtanh.pop %v2193
  %v2226 = vtanh.pop %v2194
  %v2227 = vtanh.pop %v2195
  %v2228 = vtanh.pop %v2196
  %v2229 = vtanh.pop %v2197
  %v2230 = vtanh.pop %v2198
  %v2231 = vtanh.pop %v2199
  %v2232 = vtanh.pop %v2200
  %v2233 = vtanh.pop %v2201
  %v2234 = vtanh.pop %v2202
  %v2235 = vtanh.pop %v2203
  %v2236 = vtanh.pop %v2204
  %v2237 = vtanh.pop %v2205
  %v2238 = vtanh.pop %v2206
  %v2239 = vtanh.pop %v2207
  %v2240 = vtanh.pop %v2208
  %v2241 = vtanh.pop %v2209
  %v2242 = vtanh.pop %v2210
  %v2243 = vtanh.pop %v2211
  %v2244 = vtanh.pop %v2212
  %v2245 = vld [vmem:[%s6 + $0x10] sm:$0xf]
  %v2246 = vld [vmem:[%s6 + $0x14] sm:$0xf]
  %v2247 = vld [vmem:[%s6 + $0x18] sm:$0xf]
  %v2248 = vld [vmem:[%s6 + $0x1c] sm:$0xf]
  %v2249 = vld [vmem:[%s7 + $0x6] sm:$0x1]
  %v2250 = vld [vmem:[%s7 + $0x7] sm:$0x1]
  %v2251 = vld [vmem:[%s7 + $0x8] sm:$0x1]
  %v2252 = vpack.c.bf16 %v2214, %v2213
  %v2253 = vpack.c.bf16 %v2216, %v2215
  %v2254 = vpack.c.bf16 %v2218, %v2217
  %v2255 = vpack.c.bf16 %v2220, %v2219
  %v2256 = vpack.c.bf16 %v2222, %v2221
  %v2257 = vpack.c.bf16 %v2224, %v2223
  %v2258 = vpack.c.bf16 %v2226, %v2225
  %v2259 = vpack.c.bf16 %v2228, %v2227
  %v2260 = vpack.c.bf16 %v2230, %v2229
  %v2261 = vpack.c.bf16 %v2232, %v2231
  %v2262 = vpack.c.bf16 %v2234, %v2233
  %v2263 = vpack.c.bf16 %v2236, %v2235
  %v2264 = vpack.c.bf16 %v2238, %v2237
  %v2265 = vpack.c.bf16 %v2240, %v2239
  %v2266 = vpack.c.bf16 %v2242, %v2241
  %v2267 = vpack.c.bf16 %v2244, %v2243
  %2268 = vmatpush.bf16.msra.mxu0 %v2259
  %2269 = vmatpush.bf16.msra.mxu0 %v2258
  %2270 = vmatpush.bf16.msra.mxu0 %v2257
  %2271 = vmatpush.bf16.msra.mxu0 %v2256
  %2272 = vmatpush.bf16.msra.mxu0 %v2255
  %2273 = vmatpush.bf16.msra.mxu0 %v2254
  %2274 = vmatpush.bf16.msra.mxu0 %v2253
  %2275 = vmatpush.bf16.msra.mxu0 %v2252
  %2276 = vmatmul.bf16.gmra.mxu0 %v665
  %v2277 = vpop.f32.mrf.mxu0
  %v2278 = vadd.f32 0.0, %v2277
  %v2279 = vpop.f32.mrf.mxu0
  %v2280 = vadd.f32 0.0, %v2279
  %2281 = vmatmul.bf16.gmra.mxu0 %v667
  %v2282 = vpop.f32.mrf.mxu0
  %v2283 = vadd.f32 0.0, %v2282
  %v2284 = vpop.f32.mrf.mxu0
  %v2285 = vadd.f32 0.0, %v2284
  %2286 = vmatmul.bf16.gmra.mxu0 %v669
  %v2287 = vpop.f32.mrf.mxu0
  %v2288 = vadd.f32 0.0, %v2287
  %v2289 = vpop.f32.mrf.mxu0
  %v2290 = vadd.f32 0.0, %v2289
  %2291 = vmatmul.bf16.gmra.mxu0 %v671
  %v2292 = vpop.f32.mrf.mxu0
  %v2293 = vadd.f32 0.0, %v2292
  %v2294 = vpop.f32.mrf.mxu0
  %v2295 = vadd.f32 0.0, %v2294
  %2296 = vmatmul.bf16.gmra.mxu0 %v673
  %v2297 = vpop.f32.mrf.mxu0
  %v2298 = vadd.f32 0.0, %v2297
  %v2299 = vpop.f32.mrf.mxu0
  %v2300 = vadd.f32 0.0, %v2299
  %2301 = vmatmul.bf16.gmra.mxu0 %v675
  %v2302 = vpop.f32.mrf.mxu0
  %v2303 = vadd.f32 0.0, %v2302
  %v2304 = vpop.f32.mrf.mxu0
  %v2305 = vadd.f32 0.0, %v2304
  %2306 = vmatmul.bf16.gmra.mxu0 %v677
  %v2307 = vpop.f32.mrf.mxu0
  %v2308 = vadd.f32 0.0, %v2307
  %v2309 = vpop.f32.mrf.mxu0
  %v2310 = vadd.f32 0.0, %v2309
  %2311 = vmatmul.bf16.gmra.mxu0 %v679
  %v2312 = vpop.f32.mrf.mxu0
  %v2313 = vadd.f32 0.0, %v2312
  %v2314 = vpop.f32.mrf.mxu0
  %v2315 = vadd.f32 0.0, %v2314
  %2316 = vmatmul.bf16.gmra.mxu0 %v681
  %v2317 = vpop.f32.mrf.mxu0
  %v2318 = vadd.f32 0.0, %v2317
  %v2319 = vpop.f32.mrf.mxu0
  %v2320 = vadd.f32 0.0, %v2319
  %2321 = vmatmul.bf16.gmra.mxu0 %v683
  %v2322 = vpop.f32.mrf.mxu0
  %v2323 = vadd.f32 0.0, %v2322
  %v2324 = vpop.f32.mrf.mxu0
  %v2325 = vadd.f32 0.0, %v2324
  %2326 = vmatmul.bf16.gmra.mxu0 %v685
  %v2327 = vpop.f32.mrf.mxu0
  %v2328 = vadd.f32 0.0, %v2327
  %v2329 = vpop.f32.mrf.mxu0
  %v2330 = vadd.f32 0.0, %v2329
  %2331 = vmatmul.bf16.gmra.mxu0 %v687
  %v2332 = vpop.f32.mrf.mxu0
  %v2333 = vadd.f32 0.0, %v2332
  %v2334 = vpop.f32.mrf.mxu0
  %v2335 = vadd.f32 0.0, %v2334
  %2336 = vmatmul.bf16.gmra.mxu0 %v689
  %v2337 = vpop.f32.mrf.mxu0
  %v2338 = vadd.f32 0.0, %v2337
  %v2339 = vpop.f32.mrf.mxu0
  %v2340 = vadd.f32 0.0, %v2339
  %2341 = vmatmul.bf16.gmra.mxu0 %v691
  %v2342 = vpop.f32.mrf.mxu0
  %v2343 = vadd.f32 0.0, %v2342
  %v2344 = vpop.f32.mrf.mxu0
  %v2345 = vadd.f32 0.0, %v2344
  %2346 = vmatmul.bf16.gmra.mxu0 %v693
  %v2347 = vpop.f32.mrf.mxu0
  %v2348 = vadd.f32 0.0, %v2347
  %v2349 = vpop.f32.mrf.mxu0
  %v2350 = vadd.f32 0.0, %v2349
  %2351 = vmatmul.bf16.gmra.mxu0 %v695
  %v2352 = vpop.f32.mrf.mxu0
  %v2353 = vadd.f32 0.0, %v2352
  %v2354 = vpop.f32.mrf.mxu0
  %v2355 = vadd.f32 0.0, %v2354
  %2356 = vdwg.mxu0
  %2357 = vmatpush.bf16.msra.mxu0 %v2267
  %2358 = vmatpush.bf16.msra.mxu0 %v2266
  %2359 = vmatpush.bf16.msra.mxu0 %v2265
  %2360 = vmatpush.bf16.msra.mxu0 %v2264
  %2361 = vmatpush.bf16.msra.mxu0 %v2263
  %2362 = vmatpush.bf16.msra.mxu0 %v2262
  %2363 = vmatpush.bf16.msra.mxu0 %v2261
  %2364 = vmatpush.bf16.msra.mxu0 %v2260
  %2365 = vmatmul.bf16.gmra.mxu0 %v666
  %v2366 = vpop.f32.mrf.mxu0
  %v2367 = vadd.f32 %v2278, %v2366
  %v2368 = vpop.f32.mrf.mxu0
  %v2369 = vadd.f32 %v2280, %v2368
  %2370 = vmatmul.bf16.gmra.mxu0 %v668
  %v2371 = vpop.f32.mrf.mxu0
  %v2372 = vadd.f32 %v2283, %v2371
  %v2373 = vpop.f32.mrf.mxu0
  %v2374 = vadd.f32 %v2285, %v2373
  %2375 = vmatmul.bf16.gmra.mxu0 %v670
  %v2376 = vpop.f32.mrf.mxu0
  %v2377 = vadd.f32 %v2288, %v2376
  %v2378 = vpop.f32.mrf.mxu0
  %v2379 = vadd.f32 %v2290, %v2378
  %2380 = vmatmul.bf16.gmra.mxu0 %v672
  %v2381 = vpop.f32.mrf.mxu0
  %v2382 = vadd.f32 %v2293, %v2381
  %v2383 = vpop.f32.mrf.mxu0
  %v2384 = vadd.f32 %v2295, %v2383
  %2385 = vmatmul.bf16.gmra.mxu0 %v674
  %v2386 = vpop.f32.mrf.mxu0
  %v2387 = vadd.f32 %v2298, %v2386
  %v2388 = vpop.f32.mrf.mxu0
  %v2389 = vadd.f32 %v2300, %v2388
  %2390 = vmatmul.bf16.gmra.mxu0 %v676
  %v2391 = vpop.f32.mrf.mxu0
  %v2392 = vadd.f32 %v2303, %v2391
  %v2393 = vpop.f32.mrf.mxu0
  %v2394 = vadd.f32 %v2305, %v2393
  %2395 = vmatmul.bf16.gmra.mxu0 %v678
  %v2396 = vpop.f32.mrf.mxu0
  %v2397 = vadd.f32 %v2308, %v2396
  %v2398 = vpop.f32.mrf.mxu0
  %v2399 = vadd.f32 %v2310, %v2398
  %2400 = vmatmul.bf16.gmra.mxu0 %v680
  %v2401 = vpop.f32.mrf.mxu0
  %v2402 = vadd.f32 %v2313, %v2401
  %v2403 = vpop.f32.mrf.mxu0
  %v2404 = vadd.f32 %v2315, %v2403
  %2405 = vmatmul.bf16.gmra.mxu0 %v682
  %v2406 = vpop.f32.mrf.mxu0
  %v2407 = vadd.f32 %v2318, %v2406
  %v2408 = vpop.f32.mrf.mxu0
  %v2409 = vadd.f32 %v2320, %v2408
  %2410 = vmatmul.bf16.gmra.mxu0 %v684
  %v2411 = vpop.f32.mrf.mxu0
  %v2412 = vadd.f32 %v2323, %v2411
  %v2413 = vpop.f32.mrf.mxu0
  %v2414 = vadd.f32 %v2325, %v2413
  %2415 = vmatmul.bf16.gmra.mxu0 %v686
  %v2416 = vpop.f32.mrf.mxu0
  %v2417 = vadd.f32 %v2328, %v2416
  %v2418 = vpop.f32.mrf.mxu0
  %v2419 = vadd.f32 %v2330, %v2418
  %2420 = vmatmul.bf16.gmra.mxu0 %v688
  %v2421 = vpop.f32.mrf.mxu0
  %v2422 = vadd.f32 %v2333, %v2421
  %v2423 = vpop.f32.mrf.mxu0
  %v2424 = vadd.f32 %v2335, %v2423
  %2425 = vmatmul.bf16.gmra.mxu0 %v690
  %v2426 = vpop.f32.mrf.mxu0
  %v2427 = vadd.f32 %v2338, %v2426
  %v2428 = vpop.f32.mrf.mxu0
  %v2429 = vadd.f32 %v2340, %v2428
  %2430 = vmatmul.bf16.gmra.mxu0 %v692
  %v2431 = vpop.f32.mrf.mxu0
  %v2432 = vadd.f32 %v2343, %v2431
  %v2433 = vpop.f32.mrf.mxu0
  %v2434 = vadd.f32 %v2345, %v2433
  %2435 = vmatmul.bf16.gmra.mxu0 %v694
  %v2436 = vpop.f32.mrf.mxu0
  %v2437 = vadd.f32 %v2348, %v2436
  %v2438 = vpop.f32.mrf.mxu0
  %v2439 = vadd.f32 %v2350, %v2438
  %2440 = vmatmul.bf16.gmra.mxu0 %v696
  %v2441 = vpop.f32.mrf.mxu0
  %v2442 = vadd.f32 %v2353, %v2441
  %v2443 = vpop.f32.mrf.mxu0
  %v2444 = vadd.f32 %v2355, %v2443
  %2445 = vdwg.mxu0
  %v2446 = vpack.c.bf16 %v2369, %v2367
  %v2447 = vpack.c.bf16 %v2374, %v2372
  %v2448 = vpack.c.bf16 %v2379, %v2377
  %v2449 = vpack.c.bf16 %v2384, %v2382
  %v2450 = vpack.c.bf16 %v2389, %v2387
  %v2451 = vpack.c.bf16 %v2394, %v2392
  %v2452 = vpack.c.bf16 %v2399, %v2397
  %v2453 = vpack.c.bf16 %v2404, %v2402
  %v2454 = vpack.c.bf16 %v2409, %v2407
  %v2455 = vpack.c.bf16 %v2414, %v2412
  %v2456 = vpack.c.bf16 %v2419, %v2417
  %v2457 = vpack.c.bf16 %v2424, %v2422
  %v2458 = vpack.c.bf16 %v2429, %v2427
  %v2459 = vpack.c.bf16 %v2434, %v2432
  %v2460 = vpack.c.bf16 %v2439, %v2437
  %v2461 = vpack.c.bf16 %v2444, %v2442
  %v2462 = vperm.slane %v2249, 0
  %v2467 = vunpack.c.l.b16 %v2245
  %v2468 = vunpack.c.l.b16 %v2246
  %v2469 = vunpack.c.l.b16 %v2247
  %v2470 = vunpack.c.l.b16 %v2248
  %v2471 = vpack.c.b16 %v2468, %v2467
  %v2472 = vpack.c.b16 %v2470, %v2469
  %v2476 = vsel %vm272, %v2446, 0
  %v2479 = vsel %vm272, %v2447, 0
  %v2482 = vsel %vm272, %v2448, 0
  %v2485 = vsel %vm272, %v2449, 0
  %v2488 = vsel %vm272, %v2450, 0
  %v2491 = vsel %vm272, %v2451, 0
  %v2494 = vsel %vm272, %v2452, 0
  %v2497 = vsel %vm272, %v2453, 0
  %v2500 = vsel %vm272, %v2454, 0
  %v2503 = vsel %vm272, %v2455, 0
  %v2506 = vsel %vm272, %v2456, 0
  %v2509 = vsel %vm272, %v2457, 0
  %v2512 = vsel %vm272, %v2458, 0
  %v2515 = vsel %vm272, %v2459, 0
  %v2518 = vsel %vm272, %v2460, 0
  %v2521 = vsel %vm272, %v2461, 0
  %2523 = vmatpush.bf16.msra.mxu0 0
  %2524 = vmatpush.bf16.msra.mxu0 0
  %2525 = vmatpush.bf16.msra.mxu0 0
  %2526 = vmatpush.bf16.msra.mxu0 0
  %2527 = vmatpush.bf16.msra.mxu0 0
  %2528 = vmatpush.bf16.msra.mxu0 0
  %2529 = vmatpush.bf16.msra.mxu0 %v2472
  %2530 = vmatpush.bf16.msra.mxu0 %v2471
  %2531 = vmatmul.bf16.gmra.mxu0 %v2476
  %v2532 = vpop.f32.mrf.mxu0
  %v2533 = vadd.f32 %v2462, %v2532
  %v2534 = vpop.f32.mrf.mxu0
  %v2535 = vadd.f32 %v2462, %v2534
  %2536 = vmatmul.bf16.gmra.mxu0 %v2479
  %v2537 = vpop.f32.mrf.mxu0
  %v2538 = vadd.f32 %v2462, %v2537
  %v2539 = vpop.f32.mrf.mxu0
  %v2540 = vadd.f32 %v2462, %v2539
  %2541 = vmatmul.bf16.gmra.mxu0 %v2482
  %v2542 = vpop.f32.mrf.mxu0
  %v2543 = vadd.f32 %v2462, %v2542
  %v2544 = vpop.f32.mrf.mxu0
  %v2545 = vadd.f32 %v2462, %v2544
  %2546 = vmatmul.bf16.gmra.mxu0 %v2485
  %v2547 = vpop.f32.mrf.mxu0
  %v2548 = vadd.f32 %v2462, %v2547
  %v2549 = vpop.f32.mrf.mxu0
  %v2550 = vadd.f32 %v2462, %v2549
  %2551 = vmatmul.bf16.gmra.mxu0 %v2488
  %v2552 = vpop.f32.mrf.mxu0
  %v2553 = vadd.f32 %v2462, %v2552
  %v2554 = vpop.f32.mrf.mxu0
  %v2555 = vadd.f32 %v2462, %v2554
  %2556 = vmatmul.bf16.gmra.mxu0 %v2491
  %v2557 = vpop.f32.mrf.mxu0
  %v2558 = vadd.f32 %v2462, %v2557
  %v2559 = vpop.f32.mrf.mxu0
  %v2560 = vadd.f32 %v2462, %v2559
  %2561 = vmatmul.bf16.gmra.mxu0 %v2494
  %v2562 = vpop.f32.mrf.mxu0
  %v2563 = vadd.f32 %v2462, %v2562
  %v2564 = vpop.f32.mrf.mxu0
  %v2565 = vadd.f32 %v2462, %v2564
  %2566 = vmatmul.bf16.gmra.mxu0 %v2497
  %v2567 = vpop.f32.mrf.mxu0
  %v2568 = vadd.f32 %v2462, %v2567
  %v2569 = vpop.f32.mrf.mxu0
  %v2570 = vadd.f32 %v2462, %v2569
  %2571 = vmatmul.bf16.gmra.mxu0 %v2500
  %v2572 = vpop.f32.mrf.mxu0
  %v2573 = vadd.f32 %v2462, %v2572
  %v2574 = vpop.f32.mrf.mxu0
  %v2575 = vadd.f32 %v2462, %v2574
  %2576 = vmatmul.bf16.gmra.mxu0 %v2503
  %v2577 = vpop.f32.mrf.mxu0
  %v2578 = vadd.f32 %v2462, %v2577
  %v2579 = vpop.f32.mrf.mxu0
  %v2580 = vadd.f32 %v2462, %v2579
  %2581 = vmatmul.bf16.gmra.mxu0 %v2506
  %v2582 = vpop.f32.mrf.mxu0
  %v2583 = vadd.f32 %v2462, %v2582
  %v2584 = vpop.f32.mrf.mxu0
  %v2585 = vadd.f32 %v2462, %v2584
  %2586 = vmatmul.bf16.gmra.mxu0 %v2509
  %v2587 = vpop.f32.mrf.mxu0
  %v2588 = vadd.f32 %v2462, %v2587
  %v2589 = vpop.f32.mrf.mxu0
  %v2590 = vadd.f32 %v2462, %v2589
  %2591 = vmatmul.bf16.gmra.mxu0 %v2512
  %v2592 = vpop.f32.mrf.mxu0
  %v2593 = vadd.f32 %v2462, %v2592
  %v2594 = vpop.f32.mrf.mxu0
  %v2595 = vadd.f32 %v2462, %v2594
  %2596 = vmatmul.bf16.gmra.mxu0 %v2515
  %v2597 = vpop.f32.mrf.mxu0
  %v2598 = vadd.f32 %v2462, %v2597
  %v2599 = vpop.f32.mrf.mxu0
  %v2600 = vadd.f32 %v2462, %v2599
  %2601 = vmatmul.bf16.gmra.mxu0 %v2518
  %v2602 = vpop.f32.mrf.mxu0
  %v2603 = vadd.f32 %v2462, %v2602
  %v2604 = vpop.f32.mrf.mxu0
  %v2605 = vadd.f32 %v2462, %v2604
  %2606 = vmatmul.bf16.gmra.mxu0 %v2521
  %v2607 = vpop.f32.mrf.mxu0
  %v2608 = vadd.f32 %v2462, %v2607
  %v2609 = vpop.f32.mrf.mxu0
  %v2610 = vadd.f32 %v2462, %v2609
  %2611 = vdwg.mxu0
  %v2612 = vmul.f32 %v2533, %v1076
  %v2613 = vmul.f32 %v2535, %v1081
  %v2614 = vmul.f32 %v2538, %v1086
  %v2615 = vmul.f32 %v2540, %v1091
  %v2616 = vmul.f32 %v2543, %v1096
  %v2617 = vmul.f32 %v2545, %v1101
  %v2618 = vmul.f32 %v2548, %v1106
  %v2619 = vmul.f32 %v2550, %v1111
  %v2620 = vmul.f32 %v2553, %v1116
  %v2621 = vmul.f32 %v2555, %v1121
  %v2622 = vmul.f32 %v2558, %v1126
  %v2623 = vmul.f32 %v2560, %v1131
  %v2624 = vmul.f32 %v2563, %v1136
  %v2625 = vmul.f32 %v2565, %v1141
  %v2626 = vmul.f32 %v2568, %v1146
  %v2627 = vmul.f32 %v2570, %v1151
  %v2628 = vmul.f32 %v2573, %v1156
  %v2629 = vmul.f32 %v2575, %v1161
  %v2630 = vmul.f32 %v2578, %v1166
  %v2631 = vmul.f32 %v2580, %v1171
  %v2632 = vmul.f32 %v2583, %v1176
  %v2633 = vmul.f32 %v2585, %v1181
  %v2634 = vmul.f32 %v2588, %v1186
  %v2635 = vmul.f32 %v2590, %v1191
  %v2636 = vmul.f32 %v2593, %v1196
  %v2637 = vmul.f32 %v2595, %v1201
  %v2638 = vmul.f32 %v2598, %v1206
  %v2639 = vmul.f32 %v2600, %v1211
  %v2640 = vmul.f32 %v2603, %v1216
  %v2641 = vmul.f32 %v2605, %v1221
  %v2642 = vmul.f32 %v2608, %v1226
  %v2643 = vmul.f32 %v2610, %v1231
  %v2644 = vsel %vm272, %v2612, 0.0
  %v2645 = vsel %vm272, %v2613, 0.0
  %v2646 = vadd.f32 %v2644, %v2645
  %v2647 = vsel %vm272, %v2614, 0.0
  %v2648 = vadd.f32 %v2646, %v2647
  %v2649 = vsel %vm272, %v2615, 0.0
  %v2650 = vadd.f32 %v2648, %v2649
  %v2651 = vsel %vm272, %v2616, 0.0
  %v2652 = vadd.f32 %v2650, %v2651
  %v2653 = vsel %vm272, %v2617, 0.0
  %v2654 = vadd.f32 %v2652, %v2653
  %v2655 = vsel %vm272, %v2618, 0.0
  %v2656 = vadd.f32 %v2654, %v2655
  %v2657 = vsel %vm272, %v2619, 0.0
  %v2658 = vadd.f32 %v2656, %v2657
  %v2659 = vsel %vm272, %v2620, 0.0
  %v2660 = vadd.f32 %v2658, %v2659
  %v2661 = vsel %vm272, %v2621, 0.0
  %v2662 = vadd.f32 %v2660, %v2661
  %v2663 = vsel %vm272, %v2622, 0.0
  %v2664 = vadd.f32 %v2662, %v2663
  %v2665 = vsel %vm272, %v2623, 0.0
  %v2666 = vadd.f32 %v2664, %v2665
  %v2667 = vsel %vm272, %v2624, 0.0
  %v2668 = vadd.f32 %v2666, %v2667
  %v2669 = vsel %vm272, %v2625, 0.0
  %v2670 = vadd.f32 %v2668, %v2669
  %v2671 = vsel %vm272, %v2626, 0.0
  %v2672 = vadd.f32 %v2670, %v2671
  %v2673 = vsel %vm272, %v2627, 0.0
  %v2674 = vadd.f32 %v2672, %v2673
  %v2675 = vsel %vm272, %v2628, 0.0
  %v2676 = vadd.f32 %v2674, %v2675
  %v2677 = vsel %vm272, %v2629, 0.0
  %v2678 = vadd.f32 %v2676, %v2677
  %v2679 = vsel %vm272, %v2630, 0.0
  %v2680 = vadd.f32 %v2678, %v2679
  %v2681 = vsel %vm272, %v2631, 0.0
  %v2682 = vadd.f32 %v2680, %v2681
  %v2683 = vsel %vm272, %v2632, 0.0
  %v2684 = vadd.f32 %v2682, %v2683
  %v2685 = vsel %vm272, %v2633, 0.0
  %v2686 = vadd.f32 %v2684, %v2685
  %v2687 = vsel %vm272, %v2634, 0.0
  %v2688 = vadd.f32 %v2686, %v2687
  %v2689 = vsel %vm272, %v2635, 0.0
  %v2690 = vadd.f32 %v2688, %v2689
  %v2691 = vsel %vm272, %v2636, 0.0
  %v2692 = vadd.f32 %v2690, %v2691
  %v2693 = vsel %vm272, %v2637, 0.0
  %v2694 = vadd.f32 %v2692, %v2693
  %v2695 = vsel %vm272, %v2638, 0.0
  %v2696 = vadd.f32 %v2694, %v2695
  %v2697 = vsel %vm272, %v2639, 0.0
  %v2698 = vadd.f32 %v2696, %v2697
  %v2699 = vsel %vm272, %v2640, 0.0
  %v2700 = vadd.f32 %v2698, %v2699
  %v2701 = vsel %vm272, %v2641, 0.0
  %v2702 = vadd.f32 %v2700, %v2701
  %v2703 = vsel %vm272, %v2642, 0.0
  %v2704 = vadd.f32 %v2702, %v2703
  %v2705 = vsel %vm272, %v2643, 0.0
  %v2706 = vadd.f32 %v2704, %v2705
  %v2707 = vrot.slane %v2706, 4
  %v2708 = vadd.f32 %v2706, %v2707
  %v2709 = vrot.slane %v2708, 2
  %v2710 = vadd.f32 %v2708, %v2709
  %v2711 = vrot.slane %v2710, 1
  %v2712 = vadd.f32 %v2710, %v2711
  %v2713 = vmul.f32 %v2712, %v1340
  %v2714 = vmul.f32 %v2612, %v2612
  %v2715 = vmul.f32 %v2613, %v2613
  %v2716 = vmul.f32 %v2614, %v2614
  %v2717 = vmul.f32 %v2615, %v2615
  %v2718 = vmul.f32 %v2616, %v2616
  %v2719 = vmul.f32 %v2617, %v2617
  %v2720 = vmul.f32 %v2618, %v2618
  %v2721 = vmul.f32 %v2619, %v2619
  %v2722 = vmul.f32 %v2620, %v2620
  %v2723 = vmul.f32 %v2621, %v2621
  %v2724 = vmul.f32 %v2622, %v2622
  %v2725 = vmul.f32 %v2623, %v2623
  %v2726 = vmul.f32 %v2624, %v2624
  %v2727 = vmul.f32 %v2625, %v2625
  %v2728 = vmul.f32 %v2626, %v2626
  %v2729 = vmul.f32 %v2627, %v2627
  %v2730 = vmul.f32 %v2628, %v2628
  %v2731 = vmul.f32 %v2629, %v2629
  %v2732 = vmul.f32 %v2630, %v2630
  %v2733 = vmul.f32 %v2631, %v2631
  %v2734 = vmul.f32 %v2632, %v2632
  %v2735 = vmul.f32 %v2633, %v2633
  %v2736 = vmul.f32 %v2634, %v2634
  %v2737 = vmul.f32 %v2635, %v2635
  %v2738 = vmul.f32 %v2636, %v2636
  %v2739 = vmul.f32 %v2637, %v2637
  %v2740 = vmul.f32 %v2638, %v2638
  %v2741 = vmul.f32 %v2639, %v2639
  %v2742 = vmul.f32 %v2640, %v2640
  %v2743 = vmul.f32 %v2641, %v2641
  %v2744 = vmul.f32 %v2642, %v2642
  %v2745 = vmul.f32 %v2643, %v2643
  %v2746 = vsel %vm272, %v2714, 0.0
  %v2747 = vsel %vm272, %v2715, 0.0
  %v2748 = vadd.f32 %v2746, %v2747
  %v2749 = vsel %vm272, %v2716, 0.0
  %v2750 = vadd.f32 %v2748, %v2749
  %v2751 = vsel %vm272, %v2717, 0.0
  %v2752 = vadd.f32 %v2750, %v2751
  %v2753 = vsel %vm272, %v2718, 0.0
  %v2754 = vadd.f32 %v2752, %v2753
  %v2755 = vsel %vm272, %v2719, 0.0
  %v2756 = vadd.f32 %v2754, %v2755
  %v2757 = vsel %vm272, %v2720, 0.0
  %v2758 = vadd.f32 %v2756, %v2757
  %v2759 = vsel %vm272, %v2721, 0.0
  %v2760 = vadd.f32 %v2758, %v2759
  %v2761 = vsel %vm272, %v2722, 0.0
  %v2762 = vadd.f32 %v2760, %v2761
  %v2763 = vsel %vm272, %v2723, 0.0
  %v2764 = vadd.f32 %v2762, %v2763
  %v2765 = vsel %vm272, %v2724, 0.0
  %v2766 = vadd.f32 %v2764, %v2765
  %v2767 = vsel %vm272, %v2725, 0.0
  %v2768 = vadd.f32 %v2766, %v2767
  %v2769 = vsel %vm272, %v2726, 0.0
  %v2770 = vadd.f32 %v2768, %v2769
  %v2771 = vsel %vm272, %v2727, 0.0
  %v2772 = vadd.f32 %v2770, %v2771
  %v2773 = vsel %vm272, %v2728, 0.0
  %v2774 = vadd.f32 %v2772, %v2773
  %v2775 = vsel %vm272, %v2729, 0.0
  %v2776 = vadd.f32 %v2774, %v2775
  %v2777 = vsel %vm272, %v2730, 0.0
  %v2778 = vadd.f32 %v2776, %v2777
  %v2779 = vsel %vm272, %v2731, 0.0
  %v2780 = vadd.f32 %v2778, %v2779
  %v2781 = vsel %vm272, %v2732, 0.0
  %v2782 = vadd.f32 %v2780, %v2781
  %v2783 = vsel %vm272, %v2733, 0.0
  %v2784 = vadd.f32 %v2782, %v2783
  %v2785 = vsel %vm272, %v2734, 0.0
  %v2786 = vadd.f32 %v2784, %v2785
  %v2787 = vsel %vm272, %v2735, 0.0
  %v2788 = vadd.f32 %v2786, %v2787
  %v2789 = vsel %vm272, %v2736, 0.0
  %v2790 = vadd.f32 %v2788, %v2789
  %v2791 = vsel %vm272, %v2737, 0.0
  %v2792 = vadd.f32 %v2790, %v2791
  %v2793 = vsel %vm272, %v2738, 0.0
  %v2794 = vadd.f32 %v2792, %v2793
  %v2795 = vsel %vm272, %v2739, 0.0
  %v2796 = vadd.f32 %v2794, %v2795
  %v2797 = vsel %vm272, %v2740, 0.0
  %v2798 = vadd.f32 %v2796, %v2797
  %v2799 = vsel %vm272, %v2741, 0.0
  %v2800 = vadd.f32 %v2798, %v2799
  %v2801 = vsel %vm272, %v2742, 0.0
  %v2802 = vadd.f32 %v2800, %v2801
  %v2803 = vsel %vm272, %v2743, 0.0
  %v2804 = vadd.f32 %v2802, %v2803
  %v2805 = vsel %vm272, %v2744, 0.0
  %v2806 = vadd.f32 %v2804, %v2805
  %v2807 = vsel %vm272, %v2745, 0.0
  %v2808 = vadd.f32 %v2806, %v2807
  %v2809 = vrot.slane %v2808, 4
  %v2810 = vadd.f32 %v2808, %v2809
  %v2811 = vrot.slane %v2810, 2
  %v2812 = vadd.f32 %v2810, %v2811
  %v2813 = vrot.slane %v2812, 1
  %v2814 = vadd.f32 %v2812, %v2813
  %v2815 = vmul.f32 %v2814, %v1340
  %v2816 = vmul.f32 %v2713, %v2713
  %v2817 = vsub.f32 %v2815, %v2816
  %v2818 = vmax.f32 %v2817, 0.0
  %v2819 = vadd.f32 %v2818, 1e-05
  %v2820 = vrsqrt.pop %v2819
  %v2821 = vmul.f32 %v2820, %v2819
  %v2822 = vmul.f32 %v2821, %v2820
  %v2823 = vmul.f32 0.5, %v2822
  %v2824 = vsub.f32 1.5, %v2823
  %v2825 = vmul.f32 %v2820, %v2824
  %vm2826 = vweird.f32 %v2819
  %vm2827 = vweird.f32 %v2820
  %vm2828 = vmor %vm2826, %vm2827
  %v2829 = vsel %vm2828, %v2820, %v2825
  %v2830 = vmul.f32 %v2250, %v2829
  %v2831 = vmul.f32 %v2713, %v2830
  %v2832 = vsub.f32 %v2251, %v2831
  %v2833 = vperm.slane %v2830, 0
  %v2834 = vmul.f32 %v2612, %v2833
  %v2835 = vmul.f32 %v2613, %v2833
  %v2836 = vmul.f32 %v2614, %v2833
  %v2837 = vmul.f32 %v2615, %v2833
  %v2838 = vmul.f32 %v2616, %v2833
  %v2839 = vmul.f32 %v2617, %v2833
  %v2840 = vmul.f32 %v2618, %v2833
  %v2841 = vmul.f32 %v2619, %v2833
  %v2842 = vmul.f32 %v2620, %v2833
  %v2843 = vmul.f32 %v2621, %v2833
  %v2844 = vmul.f32 %v2622, %v2833
  %v2845 = vmul.f32 %v2623, %v2833
  %v2846 = vmul.f32 %v2624, %v2833
  %v2847 = vmul.f32 %v2625, %v2833
  %v2848 = vmul.f32 %v2626, %v2833
  %v2849 = vmul.f32 %v2627, %v2833
  %v2850 = vmul.f32 %v2628, %v2833
  %v2851 = vmul.f32 %v2629, %v2833
  %v2852 = vmul.f32 %v2630, %v2833
  %v2853 = vmul.f32 %v2631, %v2833
  %v2854 = vmul.f32 %v2632, %v2833
  %v2855 = vmul.f32 %v2633, %v2833
  %v2856 = vmul.f32 %v2634, %v2833
  %v2857 = vmul.f32 %v2635, %v2833
  %v2858 = vmul.f32 %v2636, %v2833
  %v2859 = vmul.f32 %v2637, %v2833
  %v2860 = vmul.f32 %v2638, %v2833
  %v2861 = vmul.f32 %v2639, %v2833
  %v2862 = vmul.f32 %v2640, %v2833
  %v2863 = vmul.f32 %v2641, %v2833
  %v2864 = vmul.f32 %v2642, %v2833
  %v2865 = vmul.f32 %v2643, %v2833
  %v2866 = vperm.slane %v2832, 0
  %v2867 = vadd.f32 %v2834, %v2866
  %v2868 = vadd.f32 %v2835, %v2866
  %v2869 = vadd.f32 %v2836, %v2866
  %v2870 = vadd.f32 %v2837, %v2866
  %v2871 = vadd.f32 %v2838, %v2866
  %v2872 = vadd.f32 %v2839, %v2866
  %v2873 = vadd.f32 %v2840, %v2866
  %v2874 = vadd.f32 %v2841, %v2866
  %v2875 = vadd.f32 %v2842, %v2866
  %v2876 = vadd.f32 %v2843, %v2866
  %v2877 = vadd.f32 %v2844, %v2866
  %v2878 = vadd.f32 %v2845, %v2866
  %v2879 = vadd.f32 %v2846, %v2866
  %v2880 = vadd.f32 %v2847, %v2866
  %v2881 = vadd.f32 %v2848, %v2866
  %v2882 = vadd.f32 %v2849, %v2866
  %v2883 = vadd.f32 %v2850, %v2866
  %v2884 = vadd.f32 %v2851, %v2866
  %v2885 = vadd.f32 %v2852, %v2866
  %v2886 = vadd.f32 %v2853, %v2866
  %v2887 = vadd.f32 %v2854, %v2866
  %v2888 = vadd.f32 %v2855, %v2866
  %v2889 = vadd.f32 %v2856, %v2866
  %v2890 = vadd.f32 %v2857, %v2866
  %v2891 = vadd.f32 %v2858, %v2866
  %v2892 = vadd.f32 %v2859, %v2866
  %v2893 = vadd.f32 %v2860, %v2866
  %v2894 = vadd.f32 %v2861, %v2866
  %v2895 = vadd.f32 %v2862, %v2866
  %v2896 = vadd.f32 %v2863, %v2866
  %v2897 = vadd.f32 %v2864, %v2866
  %v2898 = vadd.f32 %v2865, %v2866
  %v2899 = vtanh.pop %v2867
  %v2900 = vtanh.pop %v2868
  %v2901 = vtanh.pop %v2869
  %v2902 = vtanh.pop %v2870
  %v2903 = vtanh.pop %v2871
  %v2904 = vtanh.pop %v2872
  %v2905 = vtanh.pop %v2873
  %v2906 = vtanh.pop %v2874
  %v2907 = vtanh.pop %v2875
  %v2908 = vtanh.pop %v2876
  %v2909 = vtanh.pop %v2877
  %v2910 = vtanh.pop %v2878
  %v2911 = vtanh.pop %v2879
  %v2912 = vtanh.pop %v2880
  %v2913 = vtanh.pop %v2881
  %v2914 = vtanh.pop %v2882
  %v2915 = vtanh.pop %v2883
  %v2916 = vtanh.pop %v2884
  %v2917 = vtanh.pop %v2885
  %v2918 = vtanh.pop %v2886
  %v2919 = vtanh.pop %v2887
  %v2920 = vtanh.pop %v2888
  %v2921 = vtanh.pop %v2889
  %v2922 = vtanh.pop %v2890
  %v2923 = vtanh.pop %v2891
  %v2924 = vtanh.pop %v2892
  %v2925 = vtanh.pop %v2893
  %v2926 = vtanh.pop %v2894
  %v2927 = vtanh.pop %v2895
  %v2928 = vtanh.pop %v2896
  %v2929 = vtanh.pop %v2897
  %v2930 = vtanh.pop %v2898
  %v2931 = vld [vmem:[%s3] sm:$0xff]
  %v2932 = vpack.c.bf16 %v2900, %v2899
  %v2933 = vpack.c.bf16 %v2902, %v2901
  %v2934 = vpack.c.bf16 %v2904, %v2903
  %v2935 = vpack.c.bf16 %v2906, %v2905
  %v2936 = vpack.c.bf16 %v2908, %v2907
  %v2937 = vpack.c.bf16 %v2910, %v2909
  %v2938 = vpack.c.bf16 %v2912, %v2911
  %v2939 = vpack.c.bf16 %v2914, %v2913
  %v2940 = vpack.c.bf16 %v2916, %v2915
  %v2941 = vpack.c.bf16 %v2918, %v2917
  %v2942 = vpack.c.bf16 %v2920, %v2919
  %v2943 = vpack.c.bf16 %v2922, %v2921
  %v2944 = vpack.c.bf16 %v2924, %v2923
  %v2945 = vpack.c.bf16 %v2926, %v2925
  %v2946 = vpack.c.bf16 %v2928, %v2927
  %v2947 = vpack.c.bf16 %v2930, %v2929
  %v2949 = vunpack.c.l.b16 %v2931
  %v2950 = vunpack.c.h.b16 %v2931
  %v2951 = vpack.c.b16 %v2949, %v2949
  %v2952 = vpack.c.b16 %v2950, %v2950
  %2955 = vmatpush.bf16.msra.mxu0 %v2939
  %2956 = vmatpush.bf16.msra.mxu0 %v2938
  %2957 = vmatpush.bf16.msra.mxu0 %v2937
  %2958 = vmatpush.bf16.msra.mxu0 %v2936
  %2959 = vmatpush.bf16.msra.mxu0 %v2935
  %2960 = vmatpush.bf16.msra.mxu0 %v2934
  %2961 = vmatpush.bf16.msra.mxu0 %v2933
  %2962 = vmatpush.bf16.msra.mxu0 %v2932
  %2963 = vmatmul.bf16.gmra.mxu0 %v2951
  %v2964 = vpop.f32.mrf.mxu0
  %v2965 = vadd.f32 0.0, %v2964
  %v2966 = vpop.f32.mrf.mxu0
  %2967 = vdwg.mxu0
  %2968 = vmatpush.bf16.msra.mxu0 %v2947
  %2969 = vmatpush.bf16.msra.mxu0 %v2946
  %2970 = vmatpush.bf16.msra.mxu0 %v2945
  %2971 = vmatpush.bf16.msra.mxu0 %v2944
  %2972 = vmatpush.bf16.msra.mxu0 %v2943
  %2973 = vmatpush.bf16.msra.mxu0 %v2942
  %2974 = vmatpush.bf16.msra.mxu0 %v2941
  %2975 = vmatpush.bf16.msra.mxu0 %v2940
  %2976 = vmatmul.bf16.gmra.mxu0 %v2952
  %v2977 = vpop.f32.mrf.mxu0
  %v2978 = vadd.f32 %v2965, %v2977
  %v2979 = vpop.f32.mrf.mxu0
  %2980 = vdwg.mxu0
  %v2981 = vmax.f32 %v2978, 0.0
  %v2982 = vpack.c.bf16 %v2981, %v2981
  %v2983 = vld [vmem:[%s8] sm:$0xf]
  %v2984 = vld [vmem:[%s8 + $0x4] sm:$0xf]
  %v2985 = vld [vmem:[%s8 + $0x8] sm:$0xf]
  %v2986 = vld [vmem:[%s8 + $0xc] sm:$0xf]
  %v2987 = vld [vmem:[%s9] sm:$0x1]
  %v2989 = vperm.slane %v2987, 0
  %v2995 = vunpack.c.l.b16 %v2983
  %v2996 = vunpack.c.l.b16 %v2984
  %v2997 = vunpack.c.l.b16 %v2985
  %v2998 = vunpack.c.l.b16 %v2986
  %v2999 = vpack.c.b16 %v2996, %v2995
  %v3000 = vpack.c.b16 %v2998, %v2997
  %v3004 = vsel %vm272, %v2982, 0
  %3006 = vmatpush.bf16.msra.mxu0 0
  %3007 = vmatpush.bf16.msra.mxu0 0
  %3008 = vmatpush.bf16.msra.mxu0 0
  %3009 = vmatpush.bf16.msra.mxu0 0
  %3010 = vmatpush.bf16.msra.mxu0 0
  %3011 = vmatpush.bf16.msra.mxu0 0
  %3012 = vmatpush.bf16.msra.mxu0 %v3000
  %3013 = vmatpush.bf16.msra.mxu0 %v2999
  %3014 = vmatmul.bf16.gmra.mxu0 %v3004
  %v3015 = vpop.f32.mrf.mxu0
  %v3016 = vadd.f32 %v2989, %v3015
  %v3017 = vpop.f32.mrf.mxu0
  %3018 = vdwg.mxu0
  %v3019 = vmax.f32 %v3016, 0.0
  %v3020 = vpack.c.bf16 %v3019, %v3019
  %v3021 = vld [vmem:[%s10] sm:$0xf]
  %v3022 = vld [vmem:[%s10 + $0x4] sm:$0xf]
  %v3023 = vld [vmem:[%s11] sm:$0x1]
  %v3025 = vperm.slane %v3023, 0
  %v3029 = vunpack.c.l.b16 %v3021
  %v3030 = vunpack.c.l.b16 %v3022
  %v3031 = vpack.c.b16 %v3030, %v3029
  %vm3033 = vcmask 130048
  %v3035 = vsel %vm3033, %v3020, 0
  %3037 = vmatpush.bf16.msra.mxu0 0
  %3038 = vmatpush.bf16.msra.mxu0 0
  %3039 = vmatpush.bf16.msra.mxu0 0
  %3040 = vmatpush.bf16.msra.mxu0 0
  %3041 = vmatpush.bf16.msra.mxu0 0
  %3042 = vmatpush.bf16.msra.mxu0 0
  %3043 = vmatpush.bf16.msra.mxu0 0
  %3044 = vmatpush.bf16.msra.mxu0 %v3031
  %3045 = vmatmul.bf16.gmra.mxu0 %v3035
  %v3046 = vpop.f32.mrf.mxu0
  %v3047 = vadd.f32 %v3025, %v3046
  %v3048 = vpop.f32.mrf.mxu0
  %3049 = vdwg.mxu0
  %3050 = vst [vmem:[%s12] sm:$0xff] %v3047
  // Predicated region
  $region50: #{forward.1} parent=0 // pred_check
    _
  $region51: #{forward.1} parent=0 // pred_check_branch
    %3052 = sbr.rel (0) target = $region53
  $region52: #{forward.1} parent=0 // pred_region
    _
  $region53: #{forward.1} parent=0 // pred_fallthru
    _
  // Predicated region
  $region54: #{forward.1} parent=0 // pred_check
    _
  $region55: #{forward.1} parent=0 // pred_check_branch
    %3054 = sbr.rel (0) target = $region57
  $region56: #{forward.1} parent=0 // pred_region
    _
  $region57: #{forward.1} parent=0 // pred_fallthru
    _

</llo_original>
